<compile_context>
chip_gen: v5e
topology: v5e:2x2
jax: 0.10.0
libtpu: 0.0.40
codegen_flags: <defaults>
</compile_context>

<pallas_src>
import jax
import jax.numpy as jnp
from jax.experimental import pallas as pl
from jax.experimental.pallas import tpu as pltpu


def _scale_mul_kernel(x_ref, s_ref, o_ref):
    # x_ref: (C, HW), s_ref: (C, 1) -> broadcast over lanes (last dim).
    o_ref[...] = x_ref[...] * s_ref[...]


def channel_scale_mul(x_nchw: jax.Array, s_nc11: jax.Array) -> jax.Array:
    """Computes x_nchw * s_nc11 (broadcast over H, W) with a Pallas kernel.

    x_nchw: (N, C, H, W), s_nc11: (N, C, 1, 1). Supports N == 1.
    """
    n, c, h, w = x_nchw.shape
    assert n == 1 and s_nc11.shape == (n, c, 1, 1)
    hw = h * w

    # Free, contiguous reshapes — no transpose passes.
    x2d = x_nchw.reshape(c, hw)   # (C, HW)
    s2d = s_nc11.reshape(c, 1)    # (C, 1)

    out2d = pl.pallas_call(
        _scale_mul_kernel,
        out_shape=jax.ShapeDtypeStruct((c, hw), x_nchw.dtype),
        in_specs=[
            pl.BlockSpec((c, hw), lambda: (0, 0)),  # full slab, one block
            pl.BlockSpec((c, 1), lambda: (0, 0)),   # full scale, resident
        ],
        out_specs=pl.BlockSpec((c, hw), lambda: (0, 0)),
    )(x2d, s2d)

    # Free, contiguous reshape back to NCHW.
    return out2d.reshape(n, c, h, w)


if __name__ == "__main__":
    key = jax.random.PRNGKey(0)
    k1, k2 = jax.random.split(key)

    # Shapes implied by the module's forward (N=1, C=2304, H=W=7).
    x715 = jax.random.normal(k1, (1, 2304, 7, 7), dtype=jnp.float32)
    x720 = jax.random.normal(k2, (1, 2304, 1, 1), dtype=jnp.float32)

    out = channel_scale_mul(x715, x720)
    out = jax.block_until_ready(out)

    # Correctness check against plain-JAX broadcasting semantics.
    ref = x715 * x720
    assert out.shape == (1, 2304, 7, 7) and out.dtype == jnp.float32
    assert jnp.allclose(out, ref, atol=1e-6, rtol=1e-6)

    print("KERNEL_OK")
</pallas_src>

<mosaic_0001>
module attributes {stable_mosaic.version = 11 : i64} {
  func.func @_scale_mul_kernel(%arg0: memref<2304x49xf32, #tpu.memory_space<vmem>>, %arg1: memref<2304x1xf32, #tpu.memory_space<vmem>>, %arg2: memref<2304x49xf32, #tpu.memory_space<vmem>>) attributes {dimension_semantics = [], scalar_prefetch = 0 : i64, scratch_operands = 0 : i64, tpu.core_type = #tpu.core_type<tc>} {
    %c0 = arith.constant 0 : index
    %c0_0 = arith.constant 0 : index
    %0 = vector.load %arg0[%c0, %c0_0] : memref<2304x49xf32, #tpu.memory_space<vmem>>, vector<2304x49xf32>
    %c0_1 = arith.constant 0 : index
    %c0_2 = arith.constant 0 : index
    %1 = vector.load %arg1[%c0_1, %c0_2] : memref<2304x1xf32, #tpu.memory_space<vmem>>, vector<2304x1xf32>
    %2 = vector.broadcast %1 : vector<2304x1xf32> to vector<2304x49xf32>
    %3 = arith.mulf %0, %2 : vector<2304x49xf32>
    %c0_3 = arith.constant 0 : index
    %c0_4 = arith.constant 0 : index
    %4 = vector.load %arg2[%c0_3, %c0_4] : memref<2304x49xf32, #tpu.memory_space<vmem>>, vector<2304x49xf32>
    tpu.vector_store %arg2[%c0_3, %c0_4], %3 {strides = array<i32>} : memref<2304x49xf32, #tpu.memory_space<vmem>>, vector<2304x49xf32>,
    return
  }
}

</mosaic_0001>

<llo_original>
// kernel: tpu_custom_call.1
$region0: #{tpu_custom_call.1}
  #allocation0 [shape = 'u32[]', space=smem, size = 0x4, offset = 0x4, fixed_abs, tag = 'smem constant byte address 0x4 - core index']
  #allocation1 [shape = 'u32[72,128]{1,0:T(1,128)}', space=vmem, size = 0x9000, scoped, tag = 'internal scratch']
  %s0 = inlined_call_operand.vmem [shape: f32[2304,49], index: 0, kind: input, shape index: {}]
  %s1 = inlined_call_operand.vmem [shape: f32[2304,1], index: 1, kind: input, shape index: {}]
  %s2 = inlined_call_operand.vmem [shape: f32[2304,49], index: 2, kind: output, shape index: {}]
  %s3 = sld [smem:[#allocation0]]
  $region18: #{tpu_custom_call.1} parent=0
    _
  %s5 = ssub.s32 1, %s3
  %s6 = scalar_select 0, %s5, %s3
  // Predicated region
  $region2: #{tpu_custom_call.1} parent=0 // pred_check
    _
  $region3: #{tpu_custom_call.1} parent=0 // pred_check_branch
    %8 = sbr.rel (0) target = $region5
  $region4: #{tpu_custom_call.1} parent=0 // pred_region
    _
  $region5: #{tpu_custom_call.1} parent=0 // pred_fallthru
    _
  // Predicated region
  $region6: #{tpu_custom_call.1} parent=0 // pred_check
    _
  $region7: #{tpu_custom_call.1} parent=0 // pred_check_branch
    %10 = sbr.rel (0) target = $region9
  $region8: #{tpu_custom_call.1} parent=0 // pred_region
    _
  $region9: #{tpu_custom_call.1} parent=0 // pred_fallthru
    _
  %v11 = vld [vmem:[%s0] sm:$0xff]
  %v12 = vld [vmem:[%s0 + $0x8] sm:$0xff]
  %v13 = vld [vmem:[%s0 + $0x10] sm:$0xff]
  %v14 = vld [vmem:[%s0 + $0x18] sm:$0xff]
  %v15 = vld [vmem:[%s0 + $0x20] sm:$0xff]
  %v16 = vld [vmem:[%s0 + $0x28] sm:$0xff]
  %v17 = vld [vmem:[%s0 + $0x30] sm:$0xff]
  %v18 = vld [vmem:[%s0 + $0x38] sm:$0xff]
  %v19 = vld [vmem:[%s0 + $0x40] sm:$0xff]
  %v20 = vld [vmem:[%s0 + $0x48] sm:$0xff]
  %v21 = vld [vmem:[%s0 + $0x50] sm:$0xff]
  %v22 = vld [vmem:[%s0 + $0x58] sm:$0xff]
  %v23 = vld [vmem:[%s0 + $0x60] sm:$0xff]
  %v24 = vld [vmem:[%s0 + $0x68] sm:$0xff]
  %v25 = vld [vmem:[%s0 + $0x70] sm:$0xff]
  %v26 = vld [vmem:[%s0 + $0x78] sm:$0xff]
  %v27 = vld [vmem:[%s0 + $0x80] sm:$0xff]
  %v28 = vld [vmem:[%s0 + $0x88] sm:$0xff]
  %v29 = vld [vmem:[%s0 + $0x90] sm:$0xff]
  %v30 = vld [vmem:[%s0 + $0x98] sm:$0xff]
  %v31 = vld [vmem:[%s0 + $0xa0] sm:$0xff]
  %v32 = vld [vmem:[%s0 + $0xa8] sm:$0xff]
  %v33 = vld [vmem:[%s0 + $0xb0] sm:$0xff]
  %v34 = vld [vmem:[%s0 + $0xb8] sm:$0xff]
  %v35 = vld [vmem:[%s0 + $0xc0] sm:$0xff]
  %v36 = vld [vmem:[%s0 + $0xc8] sm:$0xff]
  %v37 = vld [vmem:[%s0 + $0xd0] sm:$0xff]
  %v38 = vld [vmem:[%s0 + $0xd8] sm:$0xff]
  %v39 = vld [vmem:[%s0 + $0xe0] sm:$0xff]
  %v40 = vld [vmem:[%s0 + $0xe8] sm:$0xff]
  %v41 = vld [vmem:[%s0 + $0xf0] sm:$0xff]
  %v42 = vld [vmem:[%s0 + $0xf8] sm:$0xff]
  %v43 = vld [vmem:[%s0 + $0x100] sm:$0xff]
  %v44 = vld [vmem:[%s0 + $0x108] sm:$0xff]
  %v45 = vld [vmem:[%s0 + $0x110] sm:$0xff]
  %v46 = vld [vmem:[%s0 + $0x118] sm:$0xff]
  %v47 = vld [vmem:[%s0 + $0x120] sm:$0xff]
  %v48 = vld [vmem:[%s0 + $0x128] sm:$0xff]
  %v49 = vld [vmem:[%s0 + $0x130] sm:$0xff]
  %v50 = vld [vmem:[%s0 + $0x138] sm:$0xff]
  %v51 = vld [vmem:[%s0 + $0x140] sm:$0xff]
  %v52 = vld [vmem:[%s0 + $0x148] sm:$0xff]
  %v53 = vld [vmem:[%s0 + $0x150] sm:$0xff]
  %v54 = vld [vmem:[%s0 + $0x158] sm:$0xff]
  %v55 = vld [vmem:[%s0 + $0x160] sm:$0xff]
  %v56 = vld [vmem:[%s0 + $0x168] sm:$0xff]
  %v57 = vld [vmem:[%s0 + $0x170] sm:$0xff]
  %v58 = vld [vmem:[%s0 + $0x178] sm:$0xff]
  %v59 = vld [vmem:[%s0 + $0x180] sm:$0xff]
  %v60 = vld [vmem:[%s0 + $0x188] sm:$0xff]
  %v61 = vld [vmem:[%s0 + $0x190] sm:$0xff]
  %v62 = vld [vmem:[%s0 + $0x198] sm:$0xff]
  %v63 = vld [vmem:[%s0 + $0x1a0] sm:$0xff]
  %v64 = vld [vmem:[%s0 + $0x1a8] sm:$0xff]
  %v65 = vld [vmem:[%s0 + $0x1b0] sm:$0xff]
  %v66 = vld [vmem:[%s0 + $0x1b8] sm:$0xff]
  %v67 = vld [vmem:[%s0 + $0x1c0] sm:$0xff]
  %v68 = vld [vmem:[%s0 + $0x1c8] sm:$0xff]
  %v69 = vld [vmem:[%s0 + $0x1d0] sm:$0xff]
  %v70 = vld [vmem:[%s0 + $0x1d8] sm:$0xff]
  %v71 = vld [vmem:[%s0 + $0x1e0] sm:$0xff]
  %v72 = vld [vmem:[%s0 + $0x1e8] sm:$0xff]
  %v73 = vld [vmem:[%s0 + $0x1f0] sm:$0xff]
  %v74 = vld [vmem:[%s0 + $0x1f8] sm:$0xff]
  %v75 = vld [vmem:[%s0 + $0x200] sm:$0xff]
  %v76 = vld [vmem:[%s0 + $0x208] sm:$0xff]
  %v77 = vld [vmem:[%s0 + $0x210] sm:$0xff]
  %v78 = vld [vmem:[%s0 + $0x218] sm:$0xff]
  %v79 = vld [vmem:[%s0 + $0x220] sm:$0xff]
  %v80 = vld [vmem:[%s0 + $0x228] sm:$0xff]
  %v81 = vld [vmem:[%s0 + $0x230] sm:$0xff]
  %v82 = vld [vmem:[%s0 + $0x238] sm:$0xff]
  %v83 = vld [vmem:[%s0 + $0x240] sm:$0xff]
  %v84 = vld [vmem:[%s0 + $0x248] sm:$0xff]
  %v85 = vld [vmem:[%s0 + $0x250] sm:$0xff]
  %v86 = vld [vmem:[%s0 + $0x258] sm:$0xff]
  %v87 = vld [vmem:[%s0 + $0x260] sm:$0xff]
  %v88 = vld [vmem:[%s0 + $0x268] sm:$0xff]
  %v89 = vld [vmem:[%s0 + $0x270] sm:$0xff]
  %v90 = vld [vmem:[%s0 + $0x278] sm:$0xff]
  %v91 = vld [vmem:[%s0 + $0x280] sm:$0xff]
  %v92 = vld [vmem:[%s0 + $0x288] sm:$0xff]
  %v93 = vld [vmem:[%s0 + $0x290] sm:$0xff]
  %v94 = vld [vmem:[%s0 + $0x298] sm:$0xff]
  %v95 = vld [vmem:[%s0 + $0x2a0] sm:$0xff]
  %v96 = vld [vmem:[%s0 + $0x2a8] sm:$0xff]
  %v97 = vld [vmem:[%s0 + $0x2b0] sm:$0xff]
  %v98 = vld [vmem:[%s0 + $0x2b8] sm:$0xff]
  %v99 = vld [vmem:[%s0 + $0x2c0] sm:$0xff]
  %v100 = vld [vmem:[%s0 + $0x2c8] sm:$0xff]
  %v101 = vld [vmem:[%s0 + $0x2d0] sm:$0xff]
  %v102 = vld [vmem:[%s0 + $0x2d8] sm:$0xff]
  %v103 = vld [vmem:[%s0 + $0x2e0] sm:$0xff]
  %v104 = vld [vmem:[%s0 + $0x2e8] sm:$0xff]
  %v105 = vld [vmem:[%s0 + $0x2f0] sm:$0xff]
  %v106 = vld [vmem:[%s0 + $0x2f8] sm:$0xff]
  %v107 = vld [vmem:[%s0 + $0x300] sm:$0xff]
  %v108 = vld [vmem:[%s0 + $0x308] sm:$0xff]
  %v109 = vld [vmem:[%s0 + $0x310] sm:$0xff]
  %v110 = vld [vmem:[%s0 + $0x318] sm:$0xff]
  %v111 = vld [vmem:[%s0 + $0x320] sm:$0xff]
  %v112 = vld [vmem:[%s0 + $0x328] sm:$0xff]
  %v113 = vld [vmem:[%s0 + $0x330] sm:$0xff]
  %v114 = vld [vmem:[%s0 + $0x338] sm:$0xff]
  %v115 = vld [vmem:[%s0 + $0x340] sm:$0xff]
  %v116 = vld [vmem:[%s0 + $0x348] sm:$0xff]
  %v117 = vld [vmem:[%s0 + $0x350] sm:$0xff]
  %v118 = vld [vmem:[%s0 + $0x358] sm:$0xff]
  %v119 = vld [vmem:[%s0 + $0x360] sm:$0xff]
  %v120 = vld [vmem:[%s0 + $0x368] sm:$0xff]
  %v121 = vld [vmem:[%s0 + $0x370] sm:$0xff]
  %v122 = vld [vmem:[%s0 + $0x378] sm:$0xff]
  %v123 = vld [vmem:[%s0 + $0x380] sm:$0xff]
  %v124 = vld [vmem:[%s0 + $0x388] sm:$0xff]
  %v125 = vld [vmem:[%s0 + $0x390] sm:$0xff]
  %v126 = vld [vmem:[%s0 + $0x398] sm:$0xff]
  %v127 = vld [vmem:[%s0 + $0x3a0] sm:$0xff]
  %v128 = vld [vmem:[%s0 + $0x3a8] sm:$0xff]
  %v129 = vld [vmem:[%s0 + $0x3b0] sm:$0xff]
  %v130 = vld [vmem:[%s0 + $0x3b8] sm:$0xff]
  %v131 = vld [vmem:[%s0 + $0x3c0] sm:$0xff]
  %v132 = vld [vmem:[%s0 + $0x3c8] sm:$0xff]
  %v133 = vld [vmem:[%s0 + $0x3d0] sm:$0xff]
  %v134 = vld [vmem:[%s0 + $0x3d8] sm:$0xff]
  %v135 = vld [vmem:[%s0 + $0x3e0] sm:$0xff]
  %v136 = vld [vmem:[%s0 + $0x3e8] sm:$0xff]
  %v137 = vld [vmem:[%s0 + $0x3f0] sm:$0xff]
  %v138 = vld [vmem:[%s0 + $0x3f8] sm:$0xff]
  %v139 = vld [vmem:[%s0 + $0x400] sm:$0xff]
  %v140 = vld [vmem:[%s0 + $0x408] sm:$0xff]
  %v141 = vld [vmem:[%s0 + $0x410] sm:$0xff]
  %v142 = vld [vmem:[%s0 + $0x418] sm:$0xff]
  %v143 = vld [vmem:[%s0 + $0x420] sm:$0xff]
  %v144 = vld [vmem:[%s0 + $0x428] sm:$0xff]
  %v145 = vld [vmem:[%s0 + $0x430] sm:$0xff]
  %v146 = vld [vmem:[%s0 + $0x438] sm:$0xff]
  %v147 = vld [vmem:[%s0 + $0x440] sm:$0xff]
  %v148 = vld [vmem:[%s0 + $0x448] sm:$0xff]
  %v149 = vld [vmem:[%s0 + $0x450] sm:$0xff]
  %v150 = vld [vmem:[%s0 + $0x458] sm:$0xff]
  %v151 = vld [vmem:[%s0 + $0x460] sm:$0xff]
  %v152 = vld [vmem:[%s0 + $0x468] sm:$0xff]
  %v153 = vld [vmem:[%s0 + $0x470] sm:$0xff]
  %v154 = vld [vmem:[%s0 + $0x478] sm:$0xff]
  %v155 = vld [vmem:[%s0 + $0x480] sm:$0xff]
  %v156 = vld [vmem:[%s0 + $0x488] sm:$0xff]
  %v157 = vld [vmem:[%s0 + $0x490] sm:$0xff]
  %v158 = vld [vmem:[%s0 + $0x498] sm:$0xff]
  %v159 = vld [vmem:[%s0 + $0x4a0] sm:$0xff]
  %v160 = vld [vmem:[%s0 + $0x4a8] sm:$0xff]
  %v161 = vld [vmem:[%s0 + $0x4b0] sm:$0xff]
  %v162 = vld [vmem:[%s0 + $0x4b8] sm:$0xff]
  %v163 = vld [vmem:[%s0 + $0x4c0] sm:$0xff]
  %v164 = vld [vmem:[%s0 + $0x4c8] sm:$0xff]
  %v165 = vld [vmem:[%s0 + $0x4d0] sm:$0xff]
  %v166 = vld [vmem:[%s0 + $0x4d8] sm:$0xff]
  %v167 = vld [vmem:[%s0 + $0x4e0] sm:$0xff]
  %v168 = vld [vmem:[%s0 + $0x4e8] sm:$0xff]
  %v169 = vld [vmem:[%s0 + $0x4f0] sm:$0xff]
  %v170 = vld [vmem:[%s0 + $0x4f8] sm:$0xff]
  %v171 = vld [vmem:[%s0 + $0x500] sm:$0xff]
  %v172 = vld [vmem:[%s0 + $0x508] sm:$0xff]
  %v173 = vld [vmem:[%s0 + $0x510] sm:$0xff]
  %v174 = vld [vmem:[%s0 + $0x518] sm:$0xff]
  %v175 = vld [vmem:[%s0 + $0x520] sm:$0xff]
  %v176 = vld [vmem:[%s0 + $0x528] sm:$0xff]
  %v177 = vld [vmem:[%s0 + $0x530] sm:$0xff]
  %v178 = vld [vmem:[%s0 + $0x538] sm:$0xff]
  %v179 = vld [vmem:[%s0 + $0x540] sm:$0xff]
  %v180 = vld [vmem:[%s0 + $0x548] sm:$0xff]
  %v181 = vld [vmem:[%s0 + $0x550] sm:$0xff]
  %v182 = vld [vmem:[%s0 + $0x558] sm:$0xff]
  %v183 = vld [vmem:[%s0 + $0x560] sm:$0xff]
  %v184 = vld [vmem:[%s0 + $0x568] sm:$0xff]
  %v185 = vld [vmem:[%s0 + $0x570] sm:$0xff]
  %v186 = vld [vmem:[%s0 + $0x578] sm:$0xff]
  %v187 = vld [vmem:[%s0 + $0x580] sm:$0xff]
  %v188 = vld [vmem:[%s0 + $0x588] sm:$0xff]
  %v189 = vld [vmem:[%s0 + $0x590] sm:$0xff]
  %v190 = vld [vmem:[%s0 + $0x598] sm:$0xff]
  %v191 = vld [vmem:[%s0 + $0x5a0] sm:$0xff]
  %v192 = vld [vmem:[%s0 + $0x5a8] sm:$0xff]
  %v193 = vld [vmem:[%s0 + $0x5b0] sm:$0xff]
  %v194 = vld [vmem:[%s0 + $0x5b8] sm:$0xff]
  %v195 = vld [vmem:[%s0 + $0x5c0] sm:$0xff]
  %v196 = vld [vmem:[%s0 + $0x5c8] sm:$0xff]
  %v197 = vld [vmem:[%s0 + $0x5d0] sm:$0xff]
  %v198 = vld [vmem:[%s0 + $0x5d8] sm:$0xff]
  %v199 = vld [vmem:[%s0 + $0x5e0] sm:$0xff]
  %v200 = vld [vmem:[%s0 + $0x5e8] sm:$0xff]
  %v201 = vld [vmem:[%s0 + $0x5f0] sm:$0xff]
  %v202 = vld [vmem:[%s0 + $0x5f8] sm:$0xff]
  %v203 = vld [vmem:[%s0 + $0x600] sm:$0xff]
  %v204 = vld [vmem:[%s0 + $0x608] sm:$0xff]
  %v205 = vld [vmem:[%s0 + $0x610] sm:$0xff]
  %v206 = vld [vmem:[%s0 + $0x618] sm:$0xff]
  %v207 = vld [vmem:[%s0 + $0x620] sm:$0xff]
  %v208 = vld [vmem:[%s0 + $0x628] sm:$0xff]
  %v209 = vld [vmem:[%s0 + $0x630] sm:$0xff]
  %v210 = vld [vmem:[%s0 + $0x638] sm:$0xff]
  %v211 = vld [vmem:[%s0 + $0x640] sm:$0xff]
  %v212 = vld [vmem:[%s0 + $0x648] sm:$0xff]
  %v213 = vld [vmem:[%s0 + $0x650] sm:$0xff]
  %v214 = vld [vmem:[%s0 + $0x658] sm:$0xff]
  %v215 = vld [vmem:[%s0 + $0x660] sm:$0xff]
  %v216 = vld [vmem:[%s0 + $0x668] sm:$0xff]
  %v217 = vld [vmem:[%s0 + $0x670] sm:$0xff]
  %v218 = vld [vmem:[%s0 + $0x678] sm:$0xff]
  %v219 = vld [vmem:[%s0 + $0x680] sm:$0xff]
  %v220 = vld [vmem:[%s0 + $0x688] sm:$0xff]
  %v221 = vld [vmem:[%s0 + $0x690] sm:$0xff]
  %v222 = vld [vmem:[%s0 + $0x698] sm:$0xff]
  %v223 = vld [vmem:[%s0 + $0x6a0] sm:$0xff]
  %v224 = vld [vmem:[%s0 + $0x6a8] sm:$0xff]
  %v225 = vld [vmem:[%s0 + $0x6b0] sm:$0xff]
  %v226 = vld [vmem:[%s0 + $0x6b8] sm:$0xff]
  %v227 = vld [vmem:[%s0 + $0x6c0] sm:$0xff]
  %v228 = vld [vmem:[%s0 + $0x6c8] sm:$0xff]
  %v229 = vld [vmem:[%s0 + $0x6d0] sm:$0xff]
  %v230 = vld [vmem:[%s0 + $0x6d8] sm:$0xff]
  %v231 = vld [vmem:[%s0 + $0x6e0] sm:$0xff]
  %v232 = vld [vmem:[%s0 + $0x6e8] sm:$0xff]
  %v233 = vld [vmem:[%s0 + $0x6f0] sm:$0xff]
  %v234 = vld [vmem:[%s0 + $0x6f8] sm:$0xff]
  %v235 = vld [vmem:[%s0 + $0x700] sm:$0xff]
  %v236 = vld [vmem:[%s0 + $0x708] sm:$0xff]
  %v237 = vld [vmem:[%s0 + $0x710] sm:$0xff]
  %v238 = vld [vmem:[%s0 + $0x718] sm:$0xff]
  %v239 = vld [vmem:[%s0 + $0x720] sm:$0xff]
  %v240 = vld [vmem:[%s0 + $0x728] sm:$0xff]
  %v241 = vld [vmem:[%s0 + $0x730] sm:$0xff]
  %v242 = vld [vmem:[%s0 + $0x738] sm:$0xff]
  %v243 = vld [vmem:[%s0 + $0x740] sm:$0xff]
  %v244 = vld [vmem:[%s0 + $0x748] sm:$0xff]
  %v245 = vld [vmem:[%s0 + $0x750] sm:$0xff]
  %v246 = vld [vmem:[%s0 + $0x758] sm:$0xff]
  %v247 = vld [vmem:[%s0 + $0x760] sm:$0xff]
  %v248 = vld [vmem:[%s0 + $0x768] sm:$0xff]
  %v249 = vld [vmem:[%s0 + $0x770] sm:$0xff]
  %v250 = vld [vmem:[%s0 + $0x778] sm:$0xff]
  %v251 = vld [vmem:[%s0 + $0x780] sm:$0xff]
  %v252 = vld [vmem:[%s0 + $0x788] sm:$0xff]
  %v253 = vld [vmem:[%s0 + $0x790] sm:$0xff]
  %v254 = vld [vmem:[%s0 + $0x798] sm:$0xff]
  %v255 = vld [vmem:[%s0 + $0x7a0] sm:$0xff]
  %v256 = vld [vmem:[%s0 + $0x7a8] sm:$0xff]
  %v257 = vld [vmem:[%s0 + $0x7b0] sm:$0xff]
  %v258 = vld [vmem:[%s0 + $0x7b8] sm:$0xff]
  %v259 = vld [vmem:[%s0 + $0x7c0] sm:$0xff]
  %v260 = vld [vmem:[%s0 + $0x7c8] sm:$0xff]
  %v261 = vld [vmem:[%s0 + $0x7d0] sm:$0xff]
  %v262 = vld [vmem:[%s0 + $0x7d8] sm:$0xff]
  %v263 = vld [vmem:[%s0 + $0x7e0] sm:$0xff]
  %v264 = vld [vmem:[%s0 + $0x7e8] sm:$0xff]
  %v265 = vld [vmem:[%s0 + $0x7f0] sm:$0xff]
  %v266 = vld [vmem:[%s0 + $0x7f8] sm:$0xff]
  %v267 = vld [vmem:[%s0 + $0x800] sm:$0xff]
  %v268 = vld [vmem:[%s0 + $0x808] sm:$0xff]
  %v269 = vld [vmem:[%s0 + $0x810] sm:$0xff]
  %v270 = vld [vmem:[%s0 + $0x818] sm:$0xff]
  %v271 = vld [vmem:[%s0 + $0x820] sm:$0xff]
  %v272 = vld [vmem:[%s0 + $0x828] sm:$0xff]
  %v273 = vld [vmem:[%s0 + $0x830] sm:$0xff]
  %v274 = vld [vmem:[%s0 + $0x838] sm:$0xff]
  %v275 = vld [vmem:[%s0 + $0x840] sm:$0xff]
  %v276 = vld [vmem:[%s0 + $0x848] sm:$0xff]
  %v277 = vld [vmem:[%s0 + $0x850] sm:$0xff]
  %v278 = vld [vmem:[%s0 + $0x858] sm:$0xff]
  %v279 = vld [vmem:[%s0 + $0x860] sm:$0xff]
  %v280 = vld [vmem:[%s0 + $0x868] sm:$0xff]
  %v281 = vld [vmem:[%s0 + $0x870] sm:$0xff]
  %v282 = vld [vmem:[%s0 + $0x878] sm:$0xff]
  %v283 = vld [vmem:[%s0 + $0x880] sm:$0xff]
  %v284 = vld [vmem:[%s0 + $0x888] sm:$0xff]
  %v285 = vld [vmem:[%s0 + $0x890] sm:$0xff]
  %v286 = vld [vmem:[%s0 + $0x898] sm:$0xff]
  %v287 = vld [vmem:[%s0 + $0x8a0] sm:$0xff]
  %v288 = vld [vmem:[%s0 + $0x8a8] sm:$0xff]
  %v289 = vld [vmem:[%s0 + $0x8b0] sm:$0xff]
  %v290 = vld [vmem:[%s0 + $0x8b8] sm:$0xff]
  %v291 = vld [vmem:[%s0 + $0x8c0] sm:$0xff]
  %v292 = vld [vmem:[%s0 + $0x8c8] sm:$0xff]
  %v293 = vld [vmem:[%s0 + $0x8d0] sm:$0xff]
  %v294 = vld [vmem:[%s0 + $0x8d8] sm:$0xff]
  %v295 = vld [vmem:[%s0 + $0x8e0] sm:$0xff]
  %v296 = vld [vmem:[%s0 + $0x8e8] sm:$0xff]
  %v297 = vld [vmem:[%s0 + $0x8f0] sm:$0xff]
  %v298 = vld [vmem:[%s0 + $0x8f8] sm:$0xff]
  %v299 = vld [vmem:[%s1] sm:$0xff]
  %v300 = vld [vmem:[%s1 + $0x8] sm:$0xff]
  %v301 = vld [vmem:[%s1 + $0x10] sm:$0xff]
  %v302 = vld [vmem:[%s1 + $0x18] sm:$0xff]
  %v303 = vld [vmem:[%s1 + $0x20] sm:$0xff]
  %v304 = vld [vmem:[%s1 + $0x28] sm:$0xff]
  %v305 = vld [vmem:[%s1 + $0x30] sm:$0xff]
  %v306 = vld [vmem:[%s1 + $0x38] sm:$0xff]
  %v307 = vld [vmem:[%s1 + $0x40] sm:$0xff]
  %v308 = vld [vmem:[%s1 + $0x48] sm:$0xff]
  %v309 = vld [vmem:[%s1 + $0x50] sm:$0xff]
  %v310 = vld [vmem:[%s1 + $0x58] sm:$0xff]
  %v311 = vld [vmem:[%s1 + $0x60] sm:$0xff]
  %v312 = vld [vmem:[%s1 + $0x68] sm:$0xff]
  %v313 = vld [vmem:[%s1 + $0x70] sm:$0xff]
  %v314 = vld [vmem:[%s1 + $0x78] sm:$0xff]
  %v315 = vld [vmem:[%s1 + $0x80] sm:$0xff]
  %v316 = vld [vmem:[%s1 + $0x88] sm:$0xff]
  %v317 = vld [vmem:[%s1 + $0x90] sm:$0xff]
  %v318 = vld [vmem:[%s1 + $0x98] sm:$0xff]
  %v319 = vld [vmem:[%s1 + $0xa0] sm:$0xff]
  %v320 = vld [vmem:[%s1 + $0xa8] sm:$0xff]
  %v321 = vld [vmem:[%s1 + $0xb0] sm:$0xff]
  %v322 = vld [vmem:[%s1 + $0xb8] sm:$0xff]
  %v323 = vld [vmem:[%s1 + $0xc0] sm:$0xff]
  %v324 = vld [vmem:[%s1 + $0xc8] sm:$0xff]
  %v325 = vld [vmem:[%s1 + $0xd0] sm:$0xff]
  %v326 = vld [vmem:[%s1 + $0xd8] sm:$0xff]
  %v327 = vld [vmem:[%s1 + $0xe0] sm:$0xff]
  %v328 = vld [vmem:[%s1 + $0xe8] sm:$0xff]
  %v329 = vld [vmem:[%s1 + $0xf0] sm:$0xff]
  %v330 = vld [vmem:[%s1 + $0xf8] sm:$0xff]
  %v331 = vld [vmem:[%s1 + $0x100] sm:$0xff]
  %v332 = vld [vmem:[%s1 + $0x108] sm:$0xff]
  %v333 = vld [vmem:[%s1 + $0x110] sm:$0xff]
  %v334 = vld [vmem:[%s1 + $0x118] sm:$0xff]
  %v335 = vld [vmem:[%s1 + $0x120] sm:$0xff]
  %v336 = vld [vmem:[%s1 + $0x128] sm:$0xff]
  %v337 = vld [vmem:[%s1 + $0x130] sm:$0xff]
  %v338 = vld [vmem:[%s1 + $0x138] sm:$0xff]
  %v339 = vld [vmem:[%s1 + $0x140] sm:$0xff]
  %v340 = vld [vmem:[%s1 + $0x148] sm:$0xff]
  %v341 = vld [vmem:[%s1 + $0x150] sm:$0xff]
  %v342 = vld [vmem:[%s1 + $0x158] sm:$0xff]
  %v343 = vld [vmem:[%s1 + $0x160] sm:$0xff]
  %v344 = vld [vmem:[%s1 + $0x168] sm:$0xff]
  %v345 = vld [vmem:[%s1 + $0x170] sm:$0xff]
  %v346 = vld [vmem:[%s1 + $0x178] sm:$0xff]
  %v347 = vld [vmem:[%s1 + $0x180] sm:$0xff]
  %v348 = vld [vmem:[%s1 + $0x188] sm:$0xff]
  %v349 = vld [vmem:[%s1 + $0x190] sm:$0xff]
  %v350 = vld [vmem:[%s1 + $0x198] sm:$0xff]
  %v351 = vld [vmem:[%s1 + $0x1a0] sm:$0xff]
  %v352 = vld [vmem:[%s1 + $0x1a8] sm:$0xff]
  %v353 = vld [vmem:[%s1 + $0x1b0] sm:$0xff]
  %v354 = vld [vmem:[%s1 + $0x1b8] sm:$0xff]
  %v355 = vld [vmem:[%s1 + $0x1c0] sm:$0xff]
  %v356 = vld [vmem:[%s1 + $0x1c8] sm:$0xff]
  %v357 = vld [vmem:[%s1 + $0x1d0] sm:$0xff]
  %v358 = vld [vmem:[%s1 + $0x1d8] sm:$0xff]
  %v359 = vld [vmem:[%s1 + $0x1e0] sm:$0xff]
  %v360 = vld [vmem:[%s1 + $0x1e8] sm:$0xff]
  %v361 = vld [vmem:[%s1 + $0x1f0] sm:$0xff]
  %v362 = vld [vmem:[%s1 + $0x1f8] sm:$0xff]
  %v363 = vld [vmem:[%s1 + $0x200] sm:$0xff]
  %v364 = vld [vmem:[%s1 + $0x208] sm:$0xff]
  %v365 = vld [vmem:[%s1 + $0x210] sm:$0xff]
  %v366 = vld [vmem:[%s1 + $0x218] sm:$0xff]
  %v367 = vld [vmem:[%s1 + $0x220] sm:$0xff]
  %v368 = vld [vmem:[%s1 + $0x228] sm:$0xff]
  %v369 = vld [vmem:[%s1 + $0x230] sm:$0xff]
  %v370 = vld [vmem:[%s1 + $0x238] sm:$0xff]
  %v371 = vld [vmem:[%s1 + $0x240] sm:$0xff]
  %v372 = vld [vmem:[%s1 + $0x248] sm:$0xff]
  %v373 = vld [vmem:[%s1 + $0x250] sm:$0xff]
  %v374 = vld [vmem:[%s1 + $0x258] sm:$0xff]
  %v375 = vld [vmem:[%s1 + $0x260] sm:$0xff]
  %v376 = vld [vmem:[%s1 + $0x268] sm:$0xff]
  %v377 = vld [vmem:[%s1 + $0x270] sm:$0xff]
  %v378 = vld [vmem:[%s1 + $0x278] sm:$0xff]
  %v379 = vld [vmem:[%s1 + $0x280] sm:$0xff]
  %v380 = vld [vmem:[%s1 + $0x288] sm:$0xff]
  %v381 = vld [vmem:[%s1 + $0x290] sm:$0xff]
  %v382 = vld [vmem:[%s1 + $0x298] sm:$0xff]
  %v383 = vld [vmem:[%s1 + $0x2a0] sm:$0xff]
  %v384 = vld [vmem:[%s1 + $0x2a8] sm:$0xff]
  %v385 = vld [vmem:[%s1 + $0x2b0] sm:$0xff]
  %v386 = vld [vmem:[%s1 + $0x2b8] sm:$0xff]
  %v387 = vld [vmem:[%s1 + $0x2c0] sm:$0xff]
  %v388 = vld [vmem:[%s1 + $0x2c8] sm:$0xff]
  %v389 = vld [vmem:[%s1 + $0x2d0] sm:$0xff]
  %v390 = vld [vmem:[%s1 + $0x2d8] sm:$0xff]
  %v391 = vld [vmem:[%s1 + $0x2e0] sm:$0xff]
  %v392 = vld [vmem:[%s1 + $0x2e8] sm:$0xff]
  %v393 = vld [vmem:[%s1 + $0x2f0] sm:$0xff]
  %v394 = vld [vmem:[%s1 + $0x2f8] sm:$0xff]
  %v395 = vld [vmem:[%s1 + $0x300] sm:$0xff]
  %v396 = vld [vmem:[%s1 + $0x308] sm:$0xff]
  %v397 = vld [vmem:[%s1 + $0x310] sm:$0xff]
  %v398 = vld [vmem:[%s1 + $0x318] sm:$0xff]
  %v399 = vld [vmem:[%s1 + $0x320] sm:$0xff]
  %v400 = vld [vmem:[%s1 + $0x328] sm:$0xff]
  %v401 = vld [vmem:[%s1 + $0x330] sm:$0xff]
  %v402 = vld [vmem:[%s1 + $0x338] sm:$0xff]
  %v403 = vld [vmem:[%s1 + $0x340] sm:$0xff]
  %v404 = vld [vmem:[%s1 + $0x348] sm:$0xff]
  %v405 = vld [vmem:[%s1 + $0x350] sm:$0xff]
  %v406 = vld [vmem:[%s1 + $0x358] sm:$0xff]
  %v407 = vld [vmem:[%s1 + $0x360] sm:$0xff]
  %v408 = vld [vmem:[%s1 + $0x368] sm:$0xff]
  %v409 = vld [vmem:[%s1 + $0x370] sm:$0xff]
  %v410 = vld [vmem:[%s1 + $0x378] sm:$0xff]
  %v411 = vld [vmem:[%s1 + $0x380] sm:$0xff]
  %v412 = vld [vmem:[%s1 + $0x388] sm:$0xff]
  %v413 = vld [vmem:[%s1 + $0x390] sm:$0xff]
  %v414 = vld [vmem:[%s1 + $0x398] sm:$0xff]
  %v415 = vld [vmem:[%s1 + $0x3a0] sm:$0xff]
  %v416 = vld [vmem:[%s1 + $0x3a8] sm:$0xff]
  %v417 = vld [vmem:[%s1 + $0x3b0] sm:$0xff]
  %v418 = vld [vmem:[%s1 + $0x3b8] sm:$0xff]
  %v419 = vld [vmem:[%s1 + $0x3c0] sm:$0xff]
  %v420 = vld [vmem:[%s1 + $0x3c8] sm:$0xff]
  %v421 = vld [vmem:[%s1 + $0x3d0] sm:$0xff]
  %v422 = vld [vmem:[%s1 + $0x3d8] sm:$0xff]
  %v423 = vld [vmem:[%s1 + $0x3e0] sm:$0xff]
  %v424 = vld [vmem:[%s1 + $0x3e8] sm:$0xff]
  %v425 = vld [vmem:[%s1 + $0x3f0] sm:$0xff]
  %v426 = vld [vmem:[%s1 + $0x3f8] sm:$0xff]
  %v427 = vld [vmem:[%s1 + $0x400] sm:$0xff]
  %v428 = vld [vmem:[%s1 + $0x408] sm:$0xff]
  %v429 = vld [vmem:[%s1 + $0x410] sm:$0xff]
  %v430 = vld [vmem:[%s1 + $0x418] sm:$0xff]
  %v431 = vld [vmem:[%s1 + $0x420] sm:$0xff]
  %v432 = vld [vmem:[%s1 + $0x428] sm:$0xff]
  %v433 = vld [vmem:[%s1 + $0x430] sm:$0xff]
  %v434 = vld [vmem:[%s1 + $0x438] sm:$0xff]
  %v435 = vld [vmem:[%s1 + $0x440] sm:$0xff]
  %v436 = vld [vmem:[%s1 + $0x448] sm:$0xff]
  %v437 = vld [vmem:[%s1 + $0x450] sm:$0xff]
  %v438 = vld [vmem:[%s1 + $0x458] sm:$0xff]
  %v439 = vld [vmem:[%s1 + $0x460] sm:$0xff]
  %v440 = vld [vmem:[%s1 + $0x468] sm:$0xff]
  %v441 = vld [vmem:[%s1 + $0x470] sm:$0xff]
  %v442 = vld [vmem:[%s1 + $0x478] sm:$0xff]
  %v443 = vld [vmem:[%s1 + $0x480] sm:$0xff]
  %v444 = vld [vmem:[%s1 + $0x488] sm:$0xff]
  %v445 = vld [vmem:[%s1 + $0x490] sm:$0xff]
  %v446 = vld [vmem:[%s1 + $0x498] sm:$0xff]
  %v447 = vld [vmem:[%s1 + $0x4a0] sm:$0xff]
  %v448 = vld [vmem:[%s1 + $0x4a8] sm:$0xff]
  %v449 = vld [vmem:[%s1 + $0x4b0] sm:$0xff]
  %v450 = vld [vmem:[%s1 + $0x4b8] sm:$0xff]
  %v451 = vld [vmem:[%s1 + $0x4c0] sm:$0xff]
  %v452 = vld [vmem:[%s1 + $0x4c8] sm:$0xff]
  %v453 = vld [vmem:[%s1 + $0x4d0] sm:$0xff]
  %v454 = vld [vmem:[%s1 + $0x4d8] sm:$0xff]
  %v455 = vld [vmem:[%s1 + $0x4e0] sm:$0xff]
  %v456 = vld [vmem:[%s1 + $0x4e8] sm:$0xff]
  %v457 = vld [vmem:[%s1 + $0x4f0] sm:$0xff]
  %v458 = vld [vmem:[%s1 + $0x4f8] sm:$0xff]
  %v459 = vld [vmem:[%s1 + $0x500] sm:$0xff]
  %v460 = vld [vmem:[%s1 + $0x508] sm:$0xff]
  %v461 = vld [vmem:[%s1 + $0x510] sm:$0xff]
  %v462 = vld [vmem:[%s1 + $0x518] sm:$0xff]
  %v463 = vld [vmem:[%s1 + $0x520] sm:$0xff]
  %v464 = vld [vmem:[%s1 + $0x528] sm:$0xff]
  %v465 = vld [vmem:[%s1 + $0x530] sm:$0xff]
  %v466 = vld [vmem:[%s1 + $0x538] sm:$0xff]
  %v467 = vld [vmem:[%s1 + $0x540] sm:$0xff]
  %v468 = vld [vmem:[%s1 + $0x548] sm:$0xff]
  %v469 = vld [vmem:[%s1 + $0x550] sm:$0xff]
  %v470 = vld [vmem:[%s1 + $0x558] sm:$0xff]
  %v471 = vld [vmem:[%s1 + $0x560] sm:$0xff]
  %v472 = vld [vmem:[%s1 + $0x568] sm:$0xff]
  %v473 = vld [vmem:[%s1 + $0x570] sm:$0xff]
  %v474 = vld [vmem:[%s1 + $0x578] sm:$0xff]
  %v475 = vld [vmem:[%s1 + $0x580] sm:$0xff]
  %v476 = vld [vmem:[%s1 + $0x588] sm:$0xff]
  %v477 = vld [vmem:[%s1 + $0x590] sm:$0xff]
  %v478 = vld [vmem:[%s1 + $0x598] sm:$0xff]
  %v479 = vld [vmem:[%s1 + $0x5a0] sm:$0xff]
  %v480 = vld [vmem:[%s1 + $0x5a8] sm:$0xff]
  %v481 = vld [vmem:[%s1 + $0x5b0] sm:$0xff]
  %v482 = vld [vmem:[%s1 + $0x5b8] sm:$0xff]
  %v483 = vld [vmem:[%s1 + $0x5c0] sm:$0xff]
  %v484 = vld [vmem:[%s1 + $0x5c8] sm:$0xff]
  %v485 = vld [vmem:[%s1 + $0x5d0] sm:$0xff]
  %v486 = vld [vmem:[%s1 + $0x5d8] sm:$0xff]
  %v487 = vld [vmem:[%s1 + $0x5e0] sm:$0xff]
  %v488 = vld [vmem:[%s1 + $0x5e8] sm:$0xff]
  %v489 = vld [vmem:[%s1 + $0x5f0] sm:$0xff]
  %v490 = vld [vmem:[%s1 + $0x5f8] sm:$0xff]
  %v491 = vld [vmem:[%s1 + $0x600] sm:$0xff]
  %v492 = vld [vmem:[%s1 + $0x608] sm:$0xff]
  %v493 = vld [vmem:[%s1 + $0x610] sm:$0xff]
  %v494 = vld [vmem:[%s1 + $0x618] sm:$0xff]
  %v495 = vld [vmem:[%s1 + $0x620] sm:$0xff]
  %v496 = vld [vmem:[%s1 + $0x628] sm:$0xff]
  %v497 = vld [vmem:[%s1 + $0x630] sm:$0xff]
  %v498 = vld [vmem:[%s1 + $0x638] sm:$0xff]
  %v499 = vld [vmem:[%s1 + $0x640] sm:$0xff]
  %v500 = vld [vmem:[%s1 + $0x648] sm:$0xff]
  %v501 = vld [vmem:[%s1 + $0x650] sm:$0xff]
  %v502 = vld [vmem:[%s1 + $0x658] sm:$0xff]
  %v503 = vld [vmem:[%s1 + $0x660] sm:$0xff]
  %v504 = vld [vmem:[%s1 + $0x668] sm:$0xff]
  %v505 = vld [vmem:[%s1 + $0x670] sm:$0xff]
  %v506 = vld [vmem:[%s1 + $0x678] sm:$0xff]
  %v507 = vld [vmem:[%s1 + $0x680] sm:$0xff]
  %v508 = vld [vmem:[%s1 + $0x688] sm:$0xff]
  %v509 = vld [vmem:[%s1 + $0x690] sm:$0xff]
  %v510 = vld [vmem:[%s1 + $0x698] sm:$0xff]
  %v511 = vld [vmem:[%s1 + $0x6a0] sm:$0xff]
  %v512 = vld [vmem:[%s1 + $0x6a8] sm:$0xff]
  %v513 = vld [vmem:[%s1 + $0x6b0] sm:$0xff]
  %v514 = vld [vmem:[%s1 + $0x6b8] sm:$0xff]
  %v515 = vld [vmem:[%s1 + $0x6c0] sm:$0xff]
  %v516 = vld [vmem:[%s1 + $0x6c8] sm:$0xff]
  %v517 = vld [vmem:[%s1 + $0x6d0] sm:$0xff]
  %v518 = vld [vmem:[%s1 + $0x6d8] sm:$0xff]
  %v519 = vld [vmem:[%s1 + $0x6e0] sm:$0xff]
  %v520 = vld [vmem:[%s1 + $0x6e8] sm:$0xff]
  %v521 = vld [vmem:[%s1 + $0x6f0] sm:$0xff]
  %v522 = vld [vmem:[%s1 + $0x6f8] sm:$0xff]
  %v523 = vld [vmem:[%s1 + $0x700] sm:$0xff]
  %v524 = vld [vmem:[%s1 + $0x708] sm:$0xff]
  %v525 = vld [vmem:[%s1 + $0x710] sm:$0xff]
  %v526 = vld [vmem:[%s1 + $0x718] sm:$0xff]
  %v527 = vld [vmem:[%s1 + $0x720] sm:$0xff]
  %v528 = vld [vmem:[%s1 + $0x728] sm:$0xff]
  %v529 = vld [vmem:[%s1 + $0x730] sm:$0xff]
  %v530 = vld [vmem:[%s1 + $0x738] sm:$0xff]
  %v531 = vld [vmem:[%s1 + $0x740] sm:$0xff]
  %v532 = vld [vmem:[%s1 + $0x748] sm:$0xff]
  %v533 = vld [vmem:[%s1 + $0x750] sm:$0xff]
  %v534 = vld [vmem:[%s1 + $0x758] sm:$0xff]
  %v535 = vld [vmem:[%s1 + $0x760] sm:$0xff]
  %v536 = vld [vmem:[%s1 + $0x768] sm:$0xff]
  %v537 = vld [vmem:[%s1 + $0x770] sm:$0xff]
  %v538 = vld [vmem:[%s1 + $0x778] sm:$0xff]
  %v539 = vld [vmem:[%s1 + $0x780] sm:$0xff]
  %v540 = vld [vmem:[%s1 + $0x788] sm:$0xff]
  %v541 = vld [vmem:[%s1 + $0x790] sm:$0xff]
  %v542 = vld [vmem:[%s1 + $0x798] sm:$0xff]
  %v543 = vld [vmem:[%s1 + $0x7a0] sm:$0xff]
  %v544 = vld [vmem:[%s1 + $0x7a8] sm:$0xff]
  %v545 = vld [vmem:[%s1 + $0x7b0] sm:$0xff]
  %v546 = vld [vmem:[%s1 + $0x7b8] sm:$0xff]
  %v547 = vld [vmem:[%s1 + $0x7c0] sm:$0xff]
  %v548 = vld [vmem:[%s1 + $0x7c8] sm:$0xff]
  %v549 = vld [vmem:[%s1 + $0x7d0] sm:$0xff]
  %v550 = vld [vmem:[%s1 + $0x7d8] sm:$0xff]
  %v551 = vld [vmem:[%s1 + $0x7e0] sm:$0xff]
  %v552 = vld [vmem:[%s1 + $0x7e8] sm:$0xff]
  %v553 = vld [vmem:[%s1 + $0x7f0] sm:$0xff]
  %v554 = vld [vmem:[%s1 + $0x7f8] sm:$0xff]
  %v555 = vld [vmem:[%s1 + $0x800] sm:$0xff]
  %v556 = vld [vmem:[%s1 + $0x808] sm:$0xff]
  %v557 = vld [vmem:[%s1 + $0x810] sm:$0xff]
  %v558 = vld [vmem:[%s1 + $0x818] sm:$0xff]
  %v559 = vld [vmem:[%s1 + $0x820] sm:$0xff]
  %v560 = vld [vmem:[%s1 + $0x828] sm:$0xff]
  %v561 = vld [vmem:[%s1 + $0x830] sm:$0xff]
  %v562 = vld [vmem:[%s1 + $0x838] sm:$0xff]
  %v563 = vld [vmem:[%s1 + $0x840] sm:$0xff]
  %v564 = vld [vmem:[%s1 + $0x848] sm:$0xff]
  %v565 = vld [vmem:[%s1 + $0x850] sm:$0xff]
  %v566 = vld [vmem:[%s1 + $0x858] sm:$0xff]
  %v567 = vld [vmem:[%s1 + $0x860] sm:$0xff]
  %v568 = vld [vmem:[%s1 + $0x868] sm:$0xff]
  %v569 = vld [vmem:[%s1 + $0x870] sm:$0xff]
  %v570 = vld [vmem:[%s1 + $0x878] sm:$0xff]
  %v571 = vld [vmem:[%s1 + $0x880] sm:$0xff]
  %v572 = vld [vmem:[%s1 + $0x888] sm:$0xff]
  %v573 = vld [vmem:[%s1 + $0x890] sm:$0xff]
  %v574 = vld [vmem:[%s1 + $0x898] sm:$0xff]
  %v575 = vld [vmem:[%s1 + $0x8a0] sm:$0xff]
  %v576 = vld [vmem:[%s1 + $0x8a8] sm:$0xff]
  %v577 = vld [vmem:[%s1 + $0x8b0] sm:$0xff]
  %v578 = vld [vmem:[%s1 + $0x8b8] sm:$0xff]
  %v579 = vld [vmem:[%s1 + $0x8c0] sm:$0xff]
  %v580 = vld [vmem:[%s1 + $0x8c8] sm:$0xff]
  %v581 = vld [vmem:[%s1 + $0x8d0] sm:$0xff]
  %v582 = vld [vmem:[%s1 + $0x8d8] sm:$0xff]
  %v583 = vld [vmem:[%s1 + $0x8e0] sm:$0xff]
  %v584 = vld [vmem:[%s1 + $0x8e8] sm:$0xff]
  %v585 = vld [vmem:[%s1 + $0x8f0] sm:$0xff]
  %v586 = vld [vmem:[%s1 + $0x8f8] sm:$0xff]
  %588 = vset.pattern.permute.xlu0 0
  %589 = vperm.xlu0 %588, %v299
  %v590 = vpop.permute.xlu0 %589
  %593 = vset.pattern.permute.xlu0 0
  %594 = vperm.xlu0 %593, %v300
  %v595 = vpop.permute.xlu0 %594
  %598 = vset.pattern.permute.xlu0 0
  %599 = vperm.xlu0 %598, %v301
  %v600 = vpop.permute.xlu0 %599
  %603 = vset.pattern.permute.xlu0 0
  %604 = vperm.xlu0 %603, %v302
  %v605 = vpop.permute.xlu0 %604
  %608 = vset.pattern.permute.xlu0 0
  %609 = vperm.xlu0 %608, %v303
  %v610 = vpop.permute.xlu0 %609
  %613 = vset.pattern.permute.xlu0 0
  %614 = vperm.xlu0 %613, %v304
  %v615 = vpop.permute.xlu0 %614
  %618 = vset.pattern.permute.xlu0 0
  %619 = vperm.xlu0 %618, %v305
  %v620 = vpop.permute.xlu0 %619
  %623 = vset.pattern.permute.xlu0 0
  %624 = vperm.xlu0 %623, %v306
  %v625 = vpop.permute.xlu0 %624
  %628 = vset.pattern.permute.xlu0 0
  %629 = vperm.xlu0 %628, %v307
  %v630 = vpop.permute.xlu0 %629
  %633 = vset.pattern.permute.xlu0 0
  %634 = vperm.xlu0 %633, %v308
  %v635 = vpop.permute.xlu0 %634
  %638 = vset.pattern.permute.xlu0 0
  %639 = vperm.xlu0 %638, %v309
  %v640 = vpop.permute.xlu0 %639
  %643 = vset.pattern.permute.xlu0 0
  %644 = vperm.xlu0 %643, %v310
  %v645 = vpop.permute.xlu0 %644
  %648 = vset.pattern.permute.xlu0 0
  %649 = vperm.xlu0 %648, %v311
  %v650 = vpop.permute.xlu0 %649
  %653 = vset.pattern.permute.xlu0 0
  %654 = vperm.xlu0 %653, %v312
  %v655 = vpop.permute.xlu0 %654
  %658 = vset.pattern.permute.xlu0 0
  %659 = vperm.xlu0 %658, %v313
  %v660 = vpop.permute.xlu0 %659
  %663 = vset.pattern.permute.xlu0 0
  %664 = vperm.xlu0 %663, %v314
  %v665 = vpop.permute.xlu0 %664
  %668 = vset.pattern.permute.xlu0 0
  %669 = vperm.xlu0 %668, %v315
  %v670 = vpop.permute.xlu0 %669
  %673 = vset.pattern.permute.xlu0 0
  %674 = vperm.xlu0 %673, %v316
  %v675 = vpop.permute.xlu0 %674
  %678 = vset.pattern.permute.xlu0 0
  %679 = vperm.xlu0 %678, %v317
  %v680 = vpop.permute.xlu0 %679
  %683 = vset.pattern.permute.xlu0 0
  %684 = vperm.xlu0 %683, %v318
  %v685 = vpop.permute.xlu0 %684
  %688 = vset.pattern.permute.xlu0 0
  %689 = vperm.xlu0 %688, %v319
  %v690 = vpop.permute.xlu0 %689
  %693 = vset.pattern.permute.xlu0 0
  %694 = vperm.xlu0 %693, %v320
  %v695 = vpop.permute.xlu0 %694
  %698 = vset.pattern.permute.xlu0 0
  %699 = vperm.xlu0 %698, %v321
  %v700 = vpop.permute.xlu0 %699
  %703 = vset.pattern.permute.xlu0 0
  %704 = vperm.xlu0 %703, %v322
  %v705 = vpop.permute.xlu0 %704
  %708 = vset.pattern.permute.xlu0 0
  %709 = vperm.xlu0 %708, %v323
  %v710 = vpop.permute.xlu0 %709
  %713 = vset.pattern.permute.xlu0 0
  %714 = vperm.xlu0 %713, %v324
  %v715 = vpop.permute.xlu0 %714
  %718 = vset.pattern.permute.xlu0 0
  %719 = vperm.xlu0 %718, %v325
  %v720 = vpop.permute.xlu0 %719
  %723 = vset.pattern.permute.xlu0 0
  %724 = vperm.xlu0 %723, %v326
  %v725 = vpop.permute.xlu0 %724
  %728 = vset.pattern.permute.xlu0 0
  %729 = vperm.xlu0 %728, %v327
  %v730 = vpop.permute.xlu0 %729
  %733 = vset.pattern.permute.xlu0 0
  %734 = vperm.xlu0 %733, %v328
  %v735 = vpop.permute.xlu0 %734
  %738 = vset.pattern.permute.xlu0 0
  %739 = vperm.xlu0 %738, %v329
  %v740 = vpop.permute.xlu0 %739
  %743 = vset.pattern.permute.xlu0 0
  %744 = vperm.xlu0 %743, %v330
  %v745 = vpop.permute.xlu0 %744
  %748 = vset.pattern.permute.xlu0 0
  %749 = vperm.xlu0 %748, %v331
  %v750 = vpop.permute.xlu0 %749
  %753 = vset.pattern.permute.xlu0 0
  %754 = vperm.xlu0 %753, %v332
  %v755 = vpop.permute.xlu0 %754
  %758 = vset.pattern.permute.xlu0 0
  %759 = vperm.xlu0 %758, %v333
  %v760 = vpop.permute.xlu0 %759
  %763 = vset.pattern.permute.xlu0 0
  %764 = vperm.xlu0 %763, %v334
  %v765 = vpop.permute.xlu0 %764
  %768 = vset.pattern.permute.xlu0 0
  %769 = vperm.xlu0 %768, %v335
  %v770 = vpop.permute.xlu0 %769
  %773 = vset.pattern.permute.xlu0 0
  %774 = vperm.xlu0 %773, %v336
  %v775 = vpop.permute.xlu0 %774
  %778 = vset.pattern.permute.xlu0 0
  %779 = vperm.xlu0 %778, %v337
  %v780 = vpop.permute.xlu0 %779
  %783 = vset.pattern.permute.xlu0 0
  %784 = vperm.xlu0 %783, %v338
  %v785 = vpop.permute.xlu0 %784
  %788 = vset.pattern.permute.xlu0 0
  %789 = vperm.xlu0 %788, %v339
  %v790 = vpop.permute.xlu0 %789
  %793 = vset.pattern.permute.xlu0 0
  %794 = vperm.xlu0 %793, %v340
  %v795 = vpop.permute.xlu0 %794
  %798 = vset.pattern.permute.xlu0 0
  %799 = vperm.xlu0 %798, %v341
  %v800 = vpop.permute.xlu0 %799
  %803 = vset.pattern.permute.xlu0 0
  %804 = vperm.xlu0 %803, %v342
  %v805 = vpop.permute.xlu0 %804
  %808 = vset.pattern.permute.xlu0 0
  %809 = vperm.xlu0 %808, %v343
  %v810 = vpop.permute.xlu0 %809
  %813 = vset.pattern.permute.xlu0 0
  %814 = vperm.xlu0 %813, %v344
  %v815 = vpop.permute.xlu0 %814
  %818 = vset.pattern.permute.xlu0 0
  %819 = vperm.xlu0 %818, %v345
  %v820 = vpop.permute.xlu0 %819
  %823 = vset.pattern.permute.xlu0 0
  %824 = vperm.xlu0 %823, %v346
  %v825 = vpop.permute.xlu0 %824
  %828 = vset.pattern.permute.xlu0 0
  %829 = vperm.xlu0 %828, %v347
  %v830 = vpop.permute.xlu0 %829
  %833 = vset.pattern.permute.xlu0 0
  %834 = vperm.xlu0 %833, %v348
  %v835 = vpop.permute.xlu0 %834
  %838 = vset.pattern.permute.xlu0 0
  %839 = vperm.xlu0 %838, %v349
  %v840 = vpop.permute.xlu0 %839
  %843 = vset.pattern.permute.xlu0 0
  %844 = vperm.xlu0 %843, %v350
  %v845 = vpop.permute.xlu0 %844
  %848 = vset.pattern.permute.xlu0 0
  %849 = vperm.xlu0 %848, %v351
  %v850 = vpop.permute.xlu0 %849
  %853 = vset.pattern.permute.xlu0 0
  %854 = vperm.xlu0 %853, %v352
  %v855 = vpop.permute.xlu0 %854
  %858 = vset.pattern.permute.xlu0 0
  %859 = vperm.xlu0 %858, %v353
  %v860 = vpop.permute.xlu0 %859
  %863 = vset.pattern.permute.xlu0 0
  %864 = vperm.xlu0 %863, %v354
  %v865 = vpop.permute.xlu0 %864
  %868 = vset.pattern.permute.xlu0 0
  %869 = vperm.xlu0 %868, %v355
  %v870 = vpop.permute.xlu0 %869
  %873 = vset.pattern.permute.xlu0 0
  %874 = vperm.xlu0 %873, %v356
  %v875 = vpop.permute.xlu0 %874
  %878 = vset.pattern.permute.xlu0 0
  %879 = vperm.xlu0 %878, %v357
  %v880 = vpop.permute.xlu0 %879
  %883 = vset.pattern.permute.xlu0 0
  %884 = vperm.xlu0 %883, %v358
  %v885 = vpop.permute.xlu0 %884
  %888 = vset.pattern.permute.xlu0 0
  %889 = vperm.xlu0 %888, %v359
  %v890 = vpop.permute.xlu0 %889
  %893 = vset.pattern.permute.xlu0 0
  %894 = vperm.xlu0 %893, %v360
  %v895 = vpop.permute.xlu0 %894
  %898 = vset.pattern.permute.xlu0 0
  %899 = vperm.xlu0 %898, %v361
  %v900 = vpop.permute.xlu0 %899
  %903 = vset.pattern.permute.xlu0 0
  %904 = vperm.xlu0 %903, %v362
  %v905 = vpop.permute.xlu0 %904
  %908 = vset.pattern.permute.xlu0 0
  %909 = vperm.xlu0 %908, %v363
  %v910 = vpop.permute.xlu0 %909
  %913 = vset.pattern.permute.xlu0 0
  %914 = vperm.xlu0 %913, %v364
  %v915 = vpop.permute.xlu0 %914
  %918 = vset.pattern.permute.xlu0 0
  %919 = vperm.xlu0 %918, %v365
  %v920 = vpop.permute.xlu0 %919
  %923 = vset.pattern.permute.xlu0 0
  %924 = vperm.xlu0 %923, %v366
  %v925 = vpop.permute.xlu0 %924
  %928 = vset.pattern.permute.xlu0 0
  %929 = vperm.xlu0 %928, %v367
  %v930 = vpop.permute.xlu0 %929
  %933 = vset.pattern.permute.xlu0 0
  %934 = vperm.xlu0 %933, %v368
  %v935 = vpop.permute.xlu0 %934
  %938 = vset.pattern.permute.xlu0 0
  %939 = vperm.xlu0 %938, %v369
  %v940 = vpop.permute.xlu0 %939
  %943 = vset.pattern.permute.xlu0 0
  %944 = vperm.xlu0 %943, %v370
  %v945 = vpop.permute.xlu0 %944
  %948 = vset.pattern.permute.xlu0 0
  %949 = vperm.xlu0 %948, %v371
  %v950 = vpop.permute.xlu0 %949
  %953 = vset.pattern.permute.xlu0 0
  %954 = vperm.xlu0 %953, %v372
  %v955 = vpop.permute.xlu0 %954
  %958 = vset.pattern.permute.xlu0 0
  %959 = vperm.xlu0 %958, %v373
  %v960 = vpop.permute.xlu0 %959
  %963 = vset.pattern.permute.xlu0 0
  %964 = vperm.xlu0 %963, %v374
  %v965 = vpop.permute.xlu0 %964
  %968 = vset.pattern.permute.xlu0 0
  %969 = vperm.xlu0 %968, %v375
  %v970 = vpop.permute.xlu0 %969
  %973 = vset.pattern.permute.xlu0 0
  %974 = vperm.xlu0 %973, %v376
  %v975 = vpop.permute.xlu0 %974
  %978 = vset.pattern.permute.xlu0 0
  %979 = vperm.xlu0 %978, %v377
  %v980 = vpop.permute.xlu0 %979
  %983 = vset.pattern.permute.xlu0 0
  %984 = vperm.xlu0 %983, %v378
  %v985 = vpop.permute.xlu0 %984
  %988 = vset.pattern.permute.xlu0 0
  %989 = vperm.xlu0 %988, %v379
  %v990 = vpop.permute.xlu0 %989
  %993 = vset.pattern.permute.xlu0 0
  %994 = vperm.xlu0 %993, %v380
  %v995 = vpop.permute.xlu0 %994
  %998 = vset.pattern.permute.xlu0 0
  %999 = vperm.xlu0 %998, %v381
  %v1000 = vpop.permute.xlu0 %999
  %1003 = vset.pattern.permute.xlu0 0
  %1004 = vperm.xlu0 %1003, %v382
  %v1005 = vpop.permute.xlu0 %1004
  %1008 = vset.pattern.permute.xlu0 0
  %1009 = vperm.xlu0 %1008, %v383
  %v1010 = vpop.permute.xlu0 %1009
  %1013 = vset.pattern.permute.xlu0 0
  %1014 = vperm.xlu0 %1013, %v384
  %v1015 = vpop.permute.xlu0 %1014
  %1018 = vset.pattern.permute.xlu0 0
  %1019 = vperm.xlu0 %1018, %v385
  %v1020 = vpop.permute.xlu0 %1019
  %1023 = vset.pattern.permute.xlu0 0
  %1024 = vperm.xlu0 %1023, %v386
  %v1025 = vpop.permute.xlu0 %1024
  %1028 = vset.pattern.permute.xlu0 0
  %1029 = vperm.xlu0 %1028, %v387
  %v1030 = vpop.permute.xlu0 %1029
  %1033 = vset.pattern.permute.xlu0 0
  %1034 = vperm.xlu0 %1033, %v388
  %v1035 = vpop.permute.xlu0 %1034
  %1038 = vset.pattern.permute.xlu0 0
  %1039 = vperm.xlu0 %1038, %v389
  %v1040 = vpop.permute.xlu0 %1039
  %1043 = vset.pattern.permute.xlu0 0
  %1044 = vperm.xlu0 %1043, %v390
  %v1045 = vpop.permute.xlu0 %1044
  %1048 = vset.pattern.permute.xlu0 0
  %1049 = vperm.xlu0 %1048, %v391
  %v1050 = vpop.permute.xlu0 %1049
  %1053 = vset.pattern.permute.xlu0 0
  %1054 = vperm.xlu0 %1053, %v392
  %v1055 = vpop.permute.xlu0 %1054
  %1058 = vset.pattern.permute.xlu0 0
  %1059 = vperm.xlu0 %1058, %v393
  %v1060 = vpop.permute.xlu0 %1059
  %1063 = vset.pattern.permute.xlu0 0
  %1064 = vperm.xlu0 %1063, %v394
  %v1065 = vpop.permute.xlu0 %1064
  %1068 = vset.pattern.permute.xlu0 0
  %1069 = vperm.xlu0 %1068, %v395
  %v1070 = vpop.permute.xlu0 %1069
  %1073 = vset.pattern.permute.xlu0 0
  %1074 = vperm.xlu0 %1073, %v396
  %v1075 = vpop.permute.xlu0 %1074
  %1078 = vset.pattern.permute.xlu0 0
  %1079 = vperm.xlu0 %1078, %v397
  %v1080 = vpop.permute.xlu0 %1079
  %1083 = vset.pattern.permute.xlu0 0
  %1084 = vperm.xlu0 %1083, %v398
  %v1085 = vpop.permute.xlu0 %1084
  %1088 = vset.pattern.permute.xlu0 0
  %1089 = vperm.xlu0 %1088, %v399
  %v1090 = vpop.permute.xlu0 %1089
  %1093 = vset.pattern.permute.xlu0 0
  %1094 = vperm.xlu0 %1093, %v400
  %v1095 = vpop.permute.xlu0 %1094
  %1098 = vset.pattern.permute.xlu0 0
  %1099 = vperm.xlu0 %1098, %v401
  %v1100 = vpop.permute.xlu0 %1099
  %1103 = vset.pattern.permute.xlu0 0
  %1104 = vperm.xlu0 %1103, %v402
  %v1105 = vpop.permute.xlu0 %1104
  %1108 = vset.pattern.permute.xlu0 0
  %1109 = vperm.xlu0 %1108, %v403
  %v1110 = vpop.permute.xlu0 %1109
  %1113 = vset.pattern.permute.xlu0 0
  %1114 = vperm.xlu0 %1113, %v404
  %v1115 = vpop.permute.xlu0 %1114
  %1118 = vset.pattern.permute.xlu0 0
  %1119 = vperm.xlu0 %1118, %v405
  %v1120 = vpop.permute.xlu0 %1119
  %1123 = vset.pattern.permute.xlu0 0
  %1124 = vperm.xlu0 %1123, %v406
  %v1125 = vpop.permute.xlu0 %1124
  %1128 = vset.pattern.permute.xlu0 0
  %1129 = vperm.xlu0 %1128, %v407
  %v1130 = vpop.permute.xlu0 %1129
  %1133 = vset.pattern.permute.xlu0 0
  %1134 = vperm.xlu0 %1133, %v408
  %v1135 = vpop.permute.xlu0 %1134
  %1138 = vset.pattern.permute.xlu0 0
  %1139 = vperm.xlu0 %1138, %v409
  %v1140 = vpop.permute.xlu0 %1139
  %1143 = vset.pattern.permute.xlu0 0
  %1144 = vperm.xlu0 %1143, %v410
  %v1145 = vpop.permute.xlu0 %1144
  %1148 = vset.pattern.permute.xlu0 0
  %1149 = vperm.xlu0 %1148, %v411
  %v1150 = vpop.permute.xlu0 %1149
  %1153 = vset.pattern.permute.xlu0 0
  %1154 = vperm.xlu0 %1153, %v412
  %v1155 = vpop.permute.xlu0 %1154
  %1158 = vset.pattern.permute.xlu0 0
  %1159 = vperm.xlu0 %1158, %v413
  %v1160 = vpop.permute.xlu0 %1159
  %1163 = vset.pattern.permute.xlu0 0
  %1164 = vperm.xlu0 %1163, %v414
  %v1165 = vpop.permute.xlu0 %1164
  %1168 = vset.pattern.permute.xlu0 0
  %1169 = vperm.xlu0 %1168, %v415
  %v1170 = vpop.permute.xlu0 %1169
  %1173 = vset.pattern.permute.xlu0 0
  %1174 = vperm.xlu0 %1173, %v416
  %v1175 = vpop.permute.xlu0 %1174
  %1178 = vset.pattern.permute.xlu0 0
  %1179 = vperm.xlu0 %1178, %v417
  %v1180 = vpop.permute.xlu0 %1179
  %1183 = vset.pattern.permute.xlu0 0
  %1184 = vperm.xlu0 %1183, %v418
  %v1185 = vpop.permute.xlu0 %1184
  %1188 = vset.pattern.permute.xlu0 0
  %1189 = vperm.xlu0 %1188, %v419
  %v1190 = vpop.permute.xlu0 %1189
  %1193 = vset.pattern.permute.xlu0 0
  %1194 = vperm.xlu0 %1193, %v420
  %v1195 = vpop.permute.xlu0 %1194
  %1198 = vset.pattern.permute.xlu0 0
  %1199 = vperm.xlu0 %1198, %v421
  %v1200 = vpop.permute.xlu0 %1199
  %1203 = vset.pattern.permute.xlu0 0
  %1204 = vperm.xlu0 %1203, %v422
  %v1205 = vpop.permute.xlu0 %1204
  %1208 = vset.pattern.permute.xlu0 0
  %1209 = vperm.xlu0 %1208, %v423
  %v1210 = vpop.permute.xlu0 %1209
  %1213 = vset.pattern.permute.xlu0 0
  %1214 = vperm.xlu0 %1213, %v424
  %v1215 = vpop.permute.xlu0 %1214
  %1218 = vset.pattern.permute.xlu0 0
  %1219 = vperm.xlu0 %1218, %v425
  %v1220 = vpop.permute.xlu0 %1219
  %1223 = vset.pattern.permute.xlu0 0
  %1224 = vperm.xlu0 %1223, %v426
  %v1225 = vpop.permute.xlu0 %1224
  %1228 = vset.pattern.permute.xlu0 0
  %1229 = vperm.xlu0 %1228, %v427
  %v1230 = vpop.permute.xlu0 %1229
  %1233 = vset.pattern.permute.xlu0 0
  %1234 = vperm.xlu0 %1233, %v428
  %v1235 = vpop.permute.xlu0 %1234
  %1238 = vset.pattern.permute.xlu0 0
  %1239 = vperm.xlu0 %1238, %v429
  %v1240 = vpop.permute.xlu0 %1239
  %1243 = vset.pattern.permute.xlu0 0
  %1244 = vperm.xlu0 %1243, %v430
  %v1245 = vpop.permute.xlu0 %1244
  %1248 = vset.pattern.permute.xlu0 0
  %1249 = vperm.xlu0 %1248, %v431
  %v1250 = vpop.permute.xlu0 %1249
  %1253 = vset.pattern.permute.xlu0 0
  %1254 = vperm.xlu0 %1253, %v432
  %v1255 = vpop.permute.xlu0 %1254
  %1258 = vset.pattern.permute.xlu0 0
  %1259 = vperm.xlu0 %1258, %v433
  %v1260 = vpop.permute.xlu0 %1259
  %1263 = vset.pattern.permute.xlu0 0
  %1264 = vperm.xlu0 %1263, %v434
  %v1265 = vpop.permute.xlu0 %1264
  %1268 = vset.pattern.permute.xlu0 0
  %1269 = vperm.xlu0 %1268, %v435
  %v1270 = vpop.permute.xlu0 %1269
  %1273 = vset.pattern.permute.xlu0 0
  %1274 = vperm.xlu0 %1273, %v436
  %v1275 = vpop.permute.xlu0 %1274
  %1278 = vset.pattern.permute.xlu0 0
  %1279 = vperm.xlu0 %1278, %v437
  %v1280 = vpop.permute.xlu0 %1279
  %1283 = vset.pattern.permute.xlu0 0
  %1284 = vperm.xlu0 %1283, %v438
  %v1285 = vpop.permute.xlu0 %1284
  %1288 = vset.pattern.permute.xlu0 0
  %1289 = vperm.xlu0 %1288, %v439
  %v1290 = vpop.permute.xlu0 %1289
  %1293 = vset.pattern.permute.xlu0 0
  %1294 = vperm.xlu0 %1293, %v440
  %v1295 = vpop.permute.xlu0 %1294
  %1298 = vset.pattern.permute.xlu0 0
  %1299 = vperm.xlu0 %1298, %v441
  %v1300 = vpop.permute.xlu0 %1299
  %1303 = vset.pattern.permute.xlu0 0
  %1304 = vperm.xlu0 %1303, %v442
  %v1305 = vpop.permute.xlu0 %1304
  %1308 = vset.pattern.permute.xlu0 0
  %1309 = vperm.xlu0 %1308, %v443
  %v1310 = vpop.permute.xlu0 %1309
  %1313 = vset.pattern.permute.xlu0 0
  %1314 = vperm.xlu0 %1313, %v444
  %v1315 = vpop.permute.xlu0 %1314
  %1318 = vset.pattern.permute.xlu0 0
  %1319 = vperm.xlu0 %1318, %v445
  %v1320 = vpop.permute.xlu0 %1319
  %1323 = vset.pattern.permute.xlu0 0
  %1324 = vperm.xlu0 %1323, %v446
  %v1325 = vpop.permute.xlu0 %1324
  %1328 = vset.pattern.permute.xlu0 0
  %1329 = vperm.xlu0 %1328, %v447
  %v1330 = vpop.permute.xlu0 %1329
  %1333 = vset.pattern.permute.xlu0 0
  %1334 = vperm.xlu0 %1333, %v448
  %v1335 = vpop.permute.xlu0 %1334
  %1338 = vset.pattern.permute.xlu0 0
  %1339 = vperm.xlu0 %1338, %v449
  %v1340 = vpop.permute.xlu0 %1339
  %1343 = vset.pattern.permute.xlu0 0
  %1344 = vperm.xlu0 %1343, %v450
  %v1345 = vpop.permute.xlu0 %1344
  %1348 = vset.pattern.permute.xlu0 0
  %1349 = vperm.xlu0 %1348, %v451
  %v1350 = vpop.permute.xlu0 %1349
  %1353 = vset.pattern.permute.xlu0 0
  %1354 = vperm.xlu0 %1353, %v452
  %v1355 = vpop.permute.xlu0 %1354
  %1358 = vset.pattern.permute.xlu0 0
  %1359 = vperm.xlu0 %1358, %v453
  %v1360 = vpop.permute.xlu0 %1359
  %1363 = vset.pattern.permute.xlu0 0
  %1364 = vperm.xlu0 %1363, %v454
  %v1365 = vpop.permute.xlu0 %1364
  %1368 = vset.pattern.permute.xlu0 0
  %1369 = vperm.xlu0 %1368, %v455
  %v1370 = vpop.permute.xlu0 %1369
  %1373 = vset.pattern.permute.xlu0 0
  %1374 = vperm.xlu0 %1373, %v456
  %v1375 = vpop.permute.xlu0 %1374
  %1378 = vset.pattern.permute.xlu0 0
  %1379 = vperm.xlu0 %1378, %v457
  %v1380 = vpop.permute.xlu0 %1379
  %1383 = vset.pattern.permute.xlu0 0
  %1384 = vperm.xlu0 %1383, %v458
  %v1385 = vpop.permute.xlu0 %1384
  %1388 = vset.pattern.permute.xlu0 0
  %1389 = vperm.xlu0 %1388, %v459
  %v1390 = vpop.permute.xlu0 %1389
  %1393 = vset.pattern.permute.xlu0 0
  %1394 = vperm.xlu0 %1393, %v460
  %v1395 = vpop.permute.xlu0 %1394
  %1398 = vset.pattern.permute.xlu0 0
  %1399 = vperm.xlu0 %1398, %v461
  %v1400 = vpop.permute.xlu0 %1399
  %1403 = vset.pattern.permute.xlu0 0
  %1404 = vperm.xlu0 %1403, %v462
  %v1405 = vpop.permute.xlu0 %1404
  %1408 = vset.pattern.permute.xlu0 0
  %1409 = vperm.xlu0 %1408, %v463
  %v1410 = vpop.permute.xlu0 %1409
  %1413 = vset.pattern.permute.xlu0 0
  %1414 = vperm.xlu0 %1413, %v464
  %v1415 = vpop.permute.xlu0 %1414
  %1418 = vset.pattern.permute.xlu0 0
  %1419 = vperm.xlu0 %1418, %v465
  %v1420 = vpop.permute.xlu0 %1419
  %1423 = vset.pattern.permute.xlu0 0
  %1424 = vperm.xlu0 %1423, %v466
  %v1425 = vpop.permute.xlu0 %1424
  %1428 = vset.pattern.permute.xlu0 0
  %1429 = vperm.xlu0 %1428, %v467
  %v1430 = vpop.permute.xlu0 %1429
  %1433 = vset.pattern.permute.xlu0 0
  %1434 = vperm.xlu0 %1433, %v468
  %v1435 = vpop.permute.xlu0 %1434
  %1438 = vset.pattern.permute.xlu0 0
  %1439 = vperm.xlu0 %1438, %v469
  %v1440 = vpop.permute.xlu0 %1439
  %1443 = vset.pattern.permute.xlu0 0
  %1444 = vperm.xlu0 %1443, %v470
  %v1445 = vpop.permute.xlu0 %1444
  %1448 = vset.pattern.permute.xlu0 0
  %1449 = vperm.xlu0 %1448, %v471
  %v1450 = vpop.permute.xlu0 %1449
  %1453 = vset.pattern.permute.xlu0 0
  %1454 = vperm.xlu0 %1453, %v472
  %v1455 = vpop.permute.xlu0 %1454
  %1458 = vset.pattern.permute.xlu0 0
  %1459 = vperm.xlu0 %1458, %v473
  %v1460 = vpop.permute.xlu0 %1459
  %1463 = vset.pattern.permute.xlu0 0
  %1464 = vperm.xlu0 %1463, %v474
  %v1465 = vpop.permute.xlu0 %1464
  %1468 = vset.pattern.permute.xlu0 0
  %1469 = vperm.xlu0 %1468, %v475
  %v1470 = vpop.permute.xlu0 %1469
  %1473 = vset.pattern.permute.xlu0 0
  %1474 = vperm.xlu0 %1473, %v476
  %v1475 = vpop.permute.xlu0 %1474
  %1478 = vset.pattern.permute.xlu0 0
  %1479 = vperm.xlu0 %1478, %v477
  %v1480 = vpop.permute.xlu0 %1479
  %1483 = vset.pattern.permute.xlu0 0
  %1484 = vperm.xlu0 %1483, %v478
  %v1485 = vpop.permute.xlu0 %1484
  %1488 = vset.pattern.permute.xlu0 0
  %1489 = vperm.xlu0 %1488, %v479
  %v1490 = vpop.permute.xlu0 %1489
  %1493 = vset.pattern.permute.xlu0 0
  %1494 = vperm.xlu0 %1493, %v480
  %v1495 = vpop.permute.xlu0 %1494
  %1498 = vset.pattern.permute.xlu0 0
  %1499 = vperm.xlu0 %1498, %v481
  %v1500 = vpop.permute.xlu0 %1499
  %1503 = vset.pattern.permute.xlu0 0
  %1504 = vperm.xlu0 %1503, %v482
  %v1505 = vpop.permute.xlu0 %1504
  %1508 = vset.pattern.permute.xlu0 0
  %1509 = vperm.xlu0 %1508, %v483
  %v1510 = vpop.permute.xlu0 %1509
  %1513 = vset.pattern.permute.xlu0 0
  %1514 = vperm.xlu0 %1513, %v484
  %v1515 = vpop.permute.xlu0 %1514
  %1518 = vset.pattern.permute.xlu0 0
  %1519 = vperm.xlu0 %1518, %v485
  %v1520 = vpop.permute.xlu0 %1519
  %1523 = vset.pattern.permute.xlu0 0
  %1524 = vperm.xlu0 %1523, %v486
  %v1525 = vpop.permute.xlu0 %1524
  %1528 = vset.pattern.permute.xlu0 0
  %1529 = vperm.xlu0 %1528, %v487
  %v1530 = vpop.permute.xlu0 %1529
  %1533 = vset.pattern.permute.xlu0 0
  %1534 = vperm.xlu0 %1533, %v488
  %v1535 = vpop.permute.xlu0 %1534
  %1538 = vset.pattern.permute.xlu0 0
  %1539 = vperm.xlu0 %1538, %v489
  %v1540 = vpop.permute.xlu0 %1539
  %1543 = vset.pattern.permute.xlu0 0
  %1544 = vperm.xlu0 %1543, %v490
  %v1545 = vpop.permute.xlu0 %1544
  %1548 = vset.pattern.permute.xlu0 0
  %1549 = vperm.xlu0 %1548, %v491
  %v1550 = vpop.permute.xlu0 %1549
  %1553 = vset.pattern.permute.xlu0 0
  %1554 = vperm.xlu0 %1553, %v492
  %v1555 = vpop.permute.xlu0 %1554
  %1558 = vset.pattern.permute.xlu0 0
  %1559 = vperm.xlu0 %1558, %v493
  %v1560 = vpop.permute.xlu0 %1559
  %1563 = vset.pattern.permute.xlu0 0
  %1564 = vperm.xlu0 %1563, %v494
  %v1565 = vpop.permute.xlu0 %1564
  %1568 = vset.pattern.permute.xlu0 0
  %1569 = vperm.xlu0 %1568, %v495
  %v1570 = vpop.permute.xlu0 %1569
  %1573 = vset.pattern.permute.xlu0 0
  %1574 = vperm.xlu0 %1573, %v496
  %v1575 = vpop.permute.xlu0 %1574
  %1578 = vset.pattern.permute.xlu0 0
  %1579 = vperm.xlu0 %1578, %v497
  %v1580 = vpop.permute.xlu0 %1579
  %1583 = vset.pattern.permute.xlu0 0
  %1584 = vperm.xlu0 %1583, %v498
  %v1585 = vpop.permute.xlu0 %1584
  %1588 = vset.pattern.permute.xlu0 0
  %1589 = vperm.xlu0 %1588, %v499
  %v1590 = vpop.permute.xlu0 %1589
  %1593 = vset.pattern.permute.xlu0 0
  %1594 = vperm.xlu0 %1593, %v500
  %v1595 = vpop.permute.xlu0 %1594
  %1598 = vset.pattern.permute.xlu0 0
  %1599 = vperm.xlu0 %1598, %v501
  %v1600 = vpop.permute.xlu0 %1599
  %1603 = vset.pattern.permute.xlu0 0
  %1604 = vperm.xlu0 %1603, %v502
  %v1605 = vpop.permute.xlu0 %1604
  %1608 = vset.pattern.permute.xlu0 0
  %1609 = vperm.xlu0 %1608, %v503
  %v1610 = vpop.permute.xlu0 %1609
  %1613 = vset.pattern.permute.xlu0 0
  %1614 = vperm.xlu0 %1613, %v504
  %v1615 = vpop.permute.xlu0 %1614
  %1618 = vset.pattern.permute.xlu0 0
  %1619 = vperm.xlu0 %1618, %v505
  %v1620 = vpop.permute.xlu0 %1619
  %1623 = vset.pattern.permute.xlu0 0
  %1624 = vperm.xlu0 %1623, %v506
  %v1625 = vpop.permute.xlu0 %1624
  %1628 = vset.pattern.permute.xlu0 0
  %1629 = vperm.xlu0 %1628, %v507
  %v1630 = vpop.permute.xlu0 %1629
  %1633 = vset.pattern.permute.xlu0 0
  %1634 = vperm.xlu0 %1633, %v508
  %v1635 = vpop.permute.xlu0 %1634
  %1638 = vset.pattern.permute.xlu0 0
  %1639 = vperm.xlu0 %1638, %v509
  %v1640 = vpop.permute.xlu0 %1639
  %1643 = vset.pattern.permute.xlu0 0
  %1644 = vperm.xlu0 %1643, %v510
  %v1645 = vpop.permute.xlu0 %1644
  %1648 = vset.pattern.permute.xlu0 0
  %1649 = vperm.xlu0 %1648, %v511
  %v1650 = vpop.permute.xlu0 %1649
  %1653 = vset.pattern.permute.xlu0 0
  %1654 = vperm.xlu0 %1653, %v512
  %v1655 = vpop.permute.xlu0 %1654
  %1658 = vset.pattern.permute.xlu0 0
  %1659 = vperm.xlu0 %1658, %v513
  %v1660 = vpop.permute.xlu0 %1659
  %1663 = vset.pattern.permute.xlu0 0
  %1664 = vperm.xlu0 %1663, %v514
  %v1665 = vpop.permute.xlu0 %1664
  %1668 = vset.pattern.permute.xlu0 0
  %1669 = vperm.xlu0 %1668, %v515
  %v1670 = vpop.permute.xlu0 %1669
  %1673 = vset.pattern.permute.xlu0 0
  %1674 = vperm.xlu0 %1673, %v516
  %v1675 = vpop.permute.xlu0 %1674
  %1678 = vset.pattern.permute.xlu0 0
  %1679 = vperm.xlu0 %1678, %v517
  %v1680 = vpop.permute.xlu0 %1679
  %1683 = vset.pattern.permute.xlu0 0
  %1684 = vperm.xlu0 %1683, %v518
  %v1685 = vpop.permute.xlu0 %1684
  %1688 = vset.pattern.permute.xlu0 0
  %1689 = vperm.xlu0 %1688, %v519
  %v1690 = vpop.permute.xlu0 %1689
  %1693 = vset.pattern.permute.xlu0 0
  %1694 = vperm.xlu0 %1693, %v520
  %v1695 = vpop.permute.xlu0 %1694
  %1698 = vset.pattern.permute.xlu0 0
  %1699 = vperm.xlu0 %1698, %v521
  %v1700 = vpop.permute.xlu0 %1699
  %1703 = vset.pattern.permute.xlu0 0
  %1704 = vperm.xlu0 %1703, %v522
  %v1705 = vpop.permute.xlu0 %1704
  %1708 = vset.pattern.permute.xlu0 0
  %1709 = vperm.xlu0 %1708, %v523
  %v1710 = vpop.permute.xlu0 %1709
  %1713 = vset.pattern.permute.xlu0 0
  %1714 = vperm.xlu0 %1713, %v524
  %v1715 = vpop.permute.xlu0 %1714
  %1718 = vset.pattern.permute.xlu0 0
  %1719 = vperm.xlu0 %1718, %v525
  %v1720 = vpop.permute.xlu0 %1719
  %1723 = vset.pattern.permute.xlu0 0
  %1724 = vperm.xlu0 %1723, %v526
  %v1725 = vpop.permute.xlu0 %1724
  %1728 = vset.pattern.permute.xlu0 0
  %1729 = vperm.xlu0 %1728, %v527
  %v1730 = vpop.permute.xlu0 %1729
  %1733 = vset.pattern.permute.xlu0 0
  %1734 = vperm.xlu0 %1733, %v528
  %v1735 = vpop.permute.xlu0 %1734
  %1738 = vset.pattern.permute.xlu0 0
  %1739 = vperm.xlu0 %1738, %v529
  %v1740 = vpop.permute.xlu0 %1739
  %1743 = vset.pattern.permute.xlu0 0
  %1744 = vperm.xlu0 %1743, %v530
  %v1745 = vpop.permute.xlu0 %1744
  %1748 = vset.pattern.permute.xlu0 0
  %1749 = vperm.xlu0 %1748, %v531
  %v1750 = vpop.permute.xlu0 %1749
  %1753 = vset.pattern.permute.xlu0 0
  %1754 = vperm.xlu0 %1753, %v532
  %v1755 = vpop.permute.xlu0 %1754
  %1758 = vset.pattern.permute.xlu0 0
  %1759 = vperm.xlu0 %1758, %v533
  %v1760 = vpop.permute.xlu0 %1759
  %1763 = vset.pattern.permute.xlu0 0
  %1764 = vperm.xlu0 %1763, %v534
  %v1765 = vpop.permute.xlu0 %1764
  %1768 = vset.pattern.permute.xlu0 0
  %1769 = vperm.xlu0 %1768, %v535
  %v1770 = vpop.permute.xlu0 %1769
  %1773 = vset.pattern.permute.xlu0 0
  %1774 = vperm.xlu0 %1773, %v536
  %v1775 = vpop.permute.xlu0 %1774
  %1778 = vset.pattern.permute.xlu0 0
  %1779 = vperm.xlu0 %1778, %v537
  %v1780 = vpop.permute.xlu0 %1779
  %1783 = vset.pattern.permute.xlu0 0
  %1784 = vperm.xlu0 %1783, %v538
  %v1785 = vpop.permute.xlu0 %1784
  %1788 = vset.pattern.permute.xlu0 0
  %1789 = vperm.xlu0 %1788, %v539
  %v1790 = vpop.permute.xlu0 %1789
  %1793 = vset.pattern.permute.xlu0 0
  %1794 = vperm.xlu0 %1793, %v540
  %v1795 = vpop.permute.xlu0 %1794
  %1798 = vset.pattern.permute.xlu0 0
  %1799 = vperm.xlu0 %1798, %v541
  %v1800 = vpop.permute.xlu0 %1799
  %1803 = vset.pattern.permute.xlu0 0
  %1804 = vperm.xlu0 %1803, %v542
  %v1805 = vpop.permute.xlu0 %1804
  %1808 = vset.pattern.permute.xlu0 0
  %1809 = vperm.xlu0 %1808, %v543
  %v1810 = vpop.permute.xlu0 %1809
  %1813 = vset.pattern.permute.xlu0 0
  %1814 = vperm.xlu0 %1813, %v544
  %v1815 = vpop.permute.xlu0 %1814
  %1818 = vset.pattern.permute.xlu0 0
  %1819 = vperm.xlu0 %1818, %v545
  %v1820 = vpop.permute.xlu0 %1819
  %1823 = vset.pattern.permute.xlu0 0
  %1824 = vperm.xlu0 %1823, %v546
  %v1825 = vpop.permute.xlu0 %1824
  %1828 = vset.pattern.permute.xlu0 0
  %1829 = vperm.xlu0 %1828, %v547
  %v1830 = vpop.permute.xlu0 %1829
  %1833 = vset.pattern.permute.xlu0 0
  %1834 = vperm.xlu0 %1833, %v548
  %v1835 = vpop.permute.xlu0 %1834
  %1838 = vset.pattern.permute.xlu0 0
  %1839 = vperm.xlu0 %1838, %v549
  %v1840 = vpop.permute.xlu0 %1839
  %1843 = vset.pattern.permute.xlu0 0
  %1844 = vperm.xlu0 %1843, %v550
  %v1845 = vpop.permute.xlu0 %1844
  %1848 = vset.pattern.permute.xlu0 0
  %1849 = vperm.xlu0 %1848, %v551
  %v1850 = vpop.permute.xlu0 %1849
  %1853 = vset.pattern.permute.xlu0 0
  %1854 = vperm.xlu0 %1853, %v552
  %v1855 = vpop.permute.xlu0 %1854
  %1858 = vset.pattern.permute.xlu0 0
  %1859 = vperm.xlu0 %1858, %v553
  %v1860 = vpop.permute.xlu0 %1859
  %1863 = vset.pattern.permute.xlu0 0
  %1864 = vperm.xlu0 %1863, %v554
  %v1865 = vpop.permute.xlu0 %1864
  %1868 = vset.pattern.permute.xlu0 0
  %1869 = vperm.xlu0 %1868, %v555
  %v1870 = vpop.permute.xlu0 %1869
  %1873 = vset.pattern.permute.xlu0 0
  %1874 = vperm.xlu0 %1873, %v556
  %v1875 = vpop.permute.xlu0 %1874
  %1878 = vset.pattern.permute.xlu0 0
  %1879 = vperm.xlu0 %1878, %v557
  %v1880 = vpop.permute.xlu0 %1879
  %1883 = vset.pattern.permute.xlu0 0
  %1884 = vperm.xlu0 %1883, %v558
  %v1885 = vpop.permute.xlu0 %1884
  %1888 = vset.pattern.permute.xlu0 0
  %1889 = vperm.xlu0 %1888, %v559
  %v1890 = vpop.permute.xlu0 %1889
  %1893 = vset.pattern.permute.xlu0 0
  %1894 = vperm.xlu0 %1893, %v560
  %v1895 = vpop.permute.xlu0 %1894
  %1898 = vset.pattern.permute.xlu0 0
  %1899 = vperm.xlu0 %1898, %v561
  %v1900 = vpop.permute.xlu0 %1899
  %1903 = vset.pattern.permute.xlu0 0
  %1904 = vperm.xlu0 %1903, %v562
  %v1905 = vpop.permute.xlu0 %1904
  %1908 = vset.pattern.permute.xlu0 0
  %1909 = vperm.xlu0 %1908, %v563
  %v1910 = vpop.permute.xlu0 %1909
  %1913 = vset.pattern.permute.xlu0 0
  %1914 = vperm.xlu0 %1913, %v564
  %v1915 = vpop.permute.xlu0 %1914
  %1918 = vset.pattern.permute.xlu0 0
  %1919 = vperm.xlu0 %1918, %v565
  %v1920 = vpop.permute.xlu0 %1919
  %1923 = vset.pattern.permute.xlu0 0
  %1924 = vperm.xlu0 %1923, %v566
  %v1925 = vpop.permute.xlu0 %1924
  %1928 = vset.pattern.permute.xlu0 0
  %1929 = vperm.xlu0 %1928, %v567
  %v1930 = vpop.permute.xlu0 %1929
  %1933 = vset.pattern.permute.xlu0 0
  %1934 = vperm.xlu0 %1933, %v568
  %v1935 = vpop.permute.xlu0 %1934
  %1938 = vset.pattern.permute.xlu0 0
  %1939 = vperm.xlu0 %1938, %v569
  %v1940 = vpop.permute.xlu0 %1939
  %1943 = vset.pattern.permute.xlu0 0
  %1944 = vperm.xlu0 %1943, %v570
  %v1945 = vpop.permute.xlu0 %1944
  %1948 = vset.pattern.permute.xlu0 0
  %1949 = vperm.xlu0 %1948, %v571
  %v1950 = vpop.permute.xlu0 %1949
  %1953 = vset.pattern.permute.xlu0 0
  %1954 = vperm.xlu0 %1953, %v572
  %v1955 = vpop.permute.xlu0 %1954
  %1958 = vset.pattern.permute.xlu0 0
  %1959 = vperm.xlu0 %1958, %v573
  %v1960 = vpop.permute.xlu0 %1959
  %1963 = vset.pattern.permute.xlu0 0
  %1964 = vperm.xlu0 %1963, %v574
  %v1965 = vpop.permute.xlu0 %1964
  %1968 = vset.pattern.permute.xlu0 0
  %1969 = vperm.xlu0 %1968, %v575
  %v1970 = vpop.permute.xlu0 %1969
  %1973 = vset.pattern.permute.xlu0 0
  %1974 = vperm.xlu0 %1973, %v576
  %v1975 = vpop.permute.xlu0 %1974
  %1978 = vset.pattern.permute.xlu0 0
  %1979 = vperm.xlu0 %1978, %v577
  %v1980 = vpop.permute.xlu0 %1979
  %1983 = vset.pattern.permute.xlu0 0
  %1984 = vperm.xlu0 %1983, %v578
  %v1985 = vpop.permute.xlu0 %1984
  %1988 = vset.pattern.permute.xlu0 0
  %1989 = vperm.xlu0 %1988, %v579
  %v1990 = vpop.permute.xlu0 %1989
  %1993 = vset.pattern.permute.xlu0 0
  %1994 = vperm.xlu0 %1993, %v580
  %v1995 = vpop.permute.xlu0 %1994
  %1998 = vset.pattern.permute.xlu0 0
  %1999 = vperm.xlu0 %1998, %v581
  %v2000 = vpop.permute.xlu0 %1999
  %2003 = vset.pattern.permute.xlu0 0
  %2004 = vperm.xlu0 %2003, %v582
  %v2005 = vpop.permute.xlu0 %2004
  %2008 = vset.pattern.permute.xlu0 0
  %2009 = vperm.xlu0 %2008, %v583
  %v2010 = vpop.permute.xlu0 %2009
  %2013 = vset.pattern.permute.xlu0 0
  %2014 = vperm.xlu0 %2013, %v584
  %v2015 = vpop.permute.xlu0 %2014
  %2018 = vset.pattern.permute.xlu0 0
  %2019 = vperm.xlu0 %2018, %v585
  %v2020 = vpop.permute.xlu0 %2019
  %2023 = vset.pattern.permute.xlu0 0
  %2024 = vperm.xlu0 %2023, %v586
  %v2025 = vpop.permute.xlu0 %2024
  %v2027 = vmul.f32 %v11, %v590
  %v2028 = vmul.f32 %v12, %v595
  %v2029 = vmul.f32 %v13, %v600
  %v2030 = vmul.f32 %v14, %v605
  %v2031 = vmul.f32 %v15, %v610
  %v2032 = vmul.f32 %v16, %v615
  %v2033 = vmul.f32 %v17, %v620
  %v2034 = vmul.f32 %v18, %v625
  %v2035 = vmul.f32 %v19, %v630
  %v2036 = vmul.f32 %v20, %v635
  %v2037 = vmul.f32 %v21, %v640
  %v2038 = vmul.f32 %v22, %v645
  %v2039 = vmul.f32 %v23, %v650
  %v2040 = vmul.f32 %v24, %v655
  %v2041 = vmul.f32 %v25, %v660
  %v2042 = vmul.f32 %v26, %v665
  %v2043 = vmul.f32 %v27, %v670
  %v2044 = vmul.f32 %v28, %v675
  %v2045 = vmul.f32 %v29, %v680
  %v2046 = vmul.f32 %v30, %v685
  %v2047 = vmul.f32 %v31, %v690
  %v2048 = vmul.f32 %v32, %v695
  %v2049 = vmul.f32 %v33, %v700
  %v2050 = vmul.f32 %v34, %v705
  %v2051 = vmul.f32 %v35, %v710
  %v2052 = vmul.f32 %v36, %v715
  %v2053 = vmul.f32 %v37, %v720
  %v2054 = vmul.f32 %v38, %v725
  %v2055 = vmul.f32 %v39, %v730
  %v2056 = vmul.f32 %v40, %v735
  %v2057 = vmul.f32 %v41, %v740
  %v2058 = vmul.f32 %v42, %v745
  %v2059 = vmul.f32 %v43, %v750
  %v2060 = vmul.f32 %v44, %v755
  %v2061 = vmul.f32 %v45, %v760
  %v2062 = vmul.f32 %v46, %v765
  %v2063 = vmul.f32 %v47, %v770
  %v2064 = vmul.f32 %v48, %v775
  %v2065 = vmul.f32 %v49, %v780
  %v2066 = vmul.f32 %v50, %v785
  %v2067 = vmul.f32 %v51, %v790
  %v2068 = vmul.f32 %v52, %v795
  %v2069 = vmul.f32 %v53, %v800
  %v2070 = vmul.f32 %v54, %v805
  %v2071 = vmul.f32 %v55, %v810
  %v2072 = vmul.f32 %v56, %v815
  %v2073 = vmul.f32 %v57, %v820
  %v2074 = vmul.f32 %v58, %v825
  %v2075 = vmul.f32 %v59, %v830
  %v2076 = vmul.f32 %v60, %v835
  %v2077 = vmul.f32 %v61, %v840
  %v2078 = vmul.f32 %v62, %v845
  %v2079 = vmul.f32 %v63, %v850
  %v2080 = vmul.f32 %v64, %v855
  %v2081 = vmul.f32 %v65, %v860
  %v2082 = vmul.f32 %v66, %v865
  %v2083 = vmul.f32 %v67, %v870
  %v2084 = vmul.f32 %v68, %v875
  %v2085 = vmul.f32 %v69, %v880
  %v2086 = vmul.f32 %v70, %v885
  %v2087 = vmul.f32 %v71, %v890
  %v2088 = vmul.f32 %v72, %v895
  %v2089 = vmul.f32 %v73, %v900
  %v2090 = vmul.f32 %v74, %v905
  %v2091 = vmul.f32 %v75, %v910
  %v2092 = vmul.f32 %v76, %v915
  %v2093 = vmul.f32 %v77, %v920
  %v2094 = vmul.f32 %v78, %v925
  %v2095 = vmul.f32 %v79, %v930
  %v2096 = vmul.f32 %v80, %v935
  %v2097 = vmul.f32 %v81, %v940
  %v2098 = vmul.f32 %v82, %v945
  %v2099 = vmul.f32 %v83, %v950
  %v2100 = vmul.f32 %v84, %v955
  %v2101 = vmul.f32 %v85, %v960
  %v2102 = vmul.f32 %v86, %v965
  %v2103 = vmul.f32 %v87, %v970
  %v2104 = vmul.f32 %v88, %v975
  %v2105 = vmul.f32 %v89, %v980
  %v2106 = vmul.f32 %v90, %v985
  %v2107 = vmul.f32 %v91, %v990
  %v2108 = vmul.f32 %v92, %v995
  %v2109 = vmul.f32 %v93, %v1000
  %v2110 = vmul.f32 %v94, %v1005
  %v2111 = vmul.f32 %v95, %v1010
  %v2112 = vmul.f32 %v96, %v1015
  %v2113 = vmul.f32 %v97, %v1020
  %v2114 = vmul.f32 %v98, %v1025
  %v2115 = vmul.f32 %v99, %v1030
  %v2116 = vmul.f32 %v100, %v1035
  %v2117 = vmul.f32 %v101, %v1040
  %v2118 = vmul.f32 %v102, %v1045
  %v2119 = vmul.f32 %v103, %v1050
  %v2120 = vmul.f32 %v104, %v1055
  %v2121 = vmul.f32 %v105, %v1060
  %v2122 = vmul.f32 %v106, %v1065
  %v2123 = vmul.f32 %v107, %v1070
  %v2124 = vmul.f32 %v108, %v1075
  %v2125 = vmul.f32 %v109, %v1080
  %v2126 = vmul.f32 %v110, %v1085
  %v2127 = vmul.f32 %v111, %v1090
  %v2128 = vmul.f32 %v112, %v1095
  %v2129 = vmul.f32 %v113, %v1100
  %v2130 = vmul.f32 %v114, %v1105
  %v2131 = vmul.f32 %v115, %v1110
  %v2132 = vmul.f32 %v116, %v1115
  %v2133 = vmul.f32 %v117, %v1120
  %v2134 = vmul.f32 %v118, %v1125
  %v2135 = vmul.f32 %v119, %v1130
  %v2136 = vmul.f32 %v120, %v1135
  %v2137 = vmul.f32 %v121, %v1140
  %v2138 = vmul.f32 %v122, %v1145
  %v2139 = vmul.f32 %v123, %v1150
  %v2140 = vmul.f32 %v124, %v1155
  %v2141 = vmul.f32 %v125, %v1160
  %v2142 = vmul.f32 %v126, %v1165
  %v2143 = vmul.f32 %v127, %v1170
  %v2144 = vmul.f32 %v128, %v1175
  %v2145 = vmul.f32 %v129, %v1180
  %v2146 = vmul.f32 %v130, %v1185
  %v2147 = vmul.f32 %v131, %v1190
  %v2148 = vmul.f32 %v132, %v1195
  %v2149 = vmul.f32 %v133, %v1200
  %v2150 = vmul.f32 %v134, %v1205
  %v2151 = vmul.f32 %v135, %v1210
  %v2152 = vmul.f32 %v136, %v1215
  %v2153 = vmul.f32 %v137, %v1220
  %v2154 = vmul.f32 %v138, %v1225
  %v2155 = vmul.f32 %v139, %v1230
  %v2156 = vmul.f32 %v140, %v1235
  %v2157 = vmul.f32 %v141, %v1240
  %v2158 = vmul.f32 %v142, %v1245
  %v2159 = vmul.f32 %v143, %v1250
  %v2160 = vmul.f32 %v144, %v1255
  %v2161 = vmul.f32 %v145, %v1260
  %v2162 = vmul.f32 %v146, %v1265
  %v2163 = vmul.f32 %v147, %v1270
  %v2164 = vmul.f32 %v148, %v1275
  %v2165 = vmul.f32 %v149, %v1280
  %v2166 = vmul.f32 %v150, %v1285
  %v2167 = vmul.f32 %v151, %v1290
  %v2168 = vmul.f32 %v152, %v1295
  %v2169 = vmul.f32 %v153, %v1300
  %v2170 = vmul.f32 %v154, %v1305
  %v2171 = vmul.f32 %v155, %v1310
  %v2172 = vmul.f32 %v156, %v1315
  %v2173 = vmul.f32 %v157, %v1320
  %v2174 = vmul.f32 %v158, %v1325
  %v2175 = vmul.f32 %v159, %v1330
  %v2176 = vmul.f32 %v160, %v1335
  %v2177 = vmul.f32 %v161, %v1340
  %v2178 = vmul.f32 %v162, %v1345
  %v2179 = vmul.f32 %v163, %v1350
  %v2180 = vmul.f32 %v164, %v1355
  %v2181 = vmul.f32 %v165, %v1360
  %v2182 = vmul.f32 %v166, %v1365
  %v2183 = vmul.f32 %v167, %v1370
  %v2184 = vmul.f32 %v168, %v1375
  %v2185 = vmul.f32 %v169, %v1380
  %v2186 = vmul.f32 %v170, %v1385
  %v2187 = vmul.f32 %v171, %v1390
  %v2188 = vmul.f32 %v172, %v1395
  %v2189 = vmul.f32 %v173, %v1400
  %v2190 = vmul.f32 %v174, %v1405
  %v2191 = vmul.f32 %v175, %v1410
  %v2192 = vmul.f32 %v176, %v1415
  %v2193 = vmul.f32 %v177, %v1420
  %v2194 = vmul.f32 %v178, %v1425
  %v2195 = vmul.f32 %v179, %v1430
  %v2196 = vmul.f32 %v180, %v1435
  %v2197 = vmul.f32 %v181, %v1440
  %v2198 = vmul.f32 %v182, %v1445
  %v2199 = vmul.f32 %v183, %v1450
  %v2200 = vmul.f32 %v184, %v1455
  %v2201 = vmul.f32 %v185, %v1460
  %v2202 = vmul.f32 %v186, %v1465
  %v2203 = vmul.f32 %v187, %v1470
  %v2204 = vmul.f32 %v188, %v1475
  %v2205 = vmul.f32 %v189, %v1480
  %v2206 = vmul.f32 %v190, %v1485
  %v2207 = vmul.f32 %v191, %v1490
  %v2208 = vmul.f32 %v192, %v1495
  %v2209 = vmul.f32 %v193, %v1500
  %v2210 = vmul.f32 %v194, %v1505
  %v2211 = vmul.f32 %v195, %v1510
  %v2212 = vmul.f32 %v196, %v1515
  %v2213 = vmul.f32 %v197, %v1520
  %v2214 = vmul.f32 %v198, %v1525
  %v2215 = vmul.f32 %v199, %v1530
  %v2216 = vmul.f32 %v200, %v1535
  %v2217 = vmul.f32 %v201, %v1540
  %v2218 = vmul.f32 %v202, %v1545
  %v2219 = vmul.f32 %v203, %v1550
  %v2220 = vmul.f32 %v204, %v1555
  %v2221 = vmul.f32 %v205, %v1560
  %v2222 = vmul.f32 %v206, %v1565
  %v2223 = vmul.f32 %v207, %v1570
  %v2224 = vmul.f32 %v208, %v1575
  %v2225 = vmul.f32 %v209, %v1580
  %v2226 = vmul.f32 %v210, %v1585
  %v2227 = vmul.f32 %v211, %v1590
  %v2228 = vmul.f32 %v212, %v1595
  %v2229 = vmul.f32 %v213, %v1600
  %v2230 = vmul.f32 %v214, %v1605
  %v2231 = vmul.f32 %v215, %v1610
  %v2232 = vmul.f32 %v216, %v1615
  %v2233 = vmul.f32 %v217, %v1620
  %v2234 = vmul.f32 %v218, %v1625
  %v2235 = vmul.f32 %v219, %v1630
  %v2236 = vmul.f32 %v220, %v1635
  %v2237 = vmul.f32 %v221, %v1640
  %v2238 = vmul.f32 %v222, %v1645
  %v2239 = vmul.f32 %v223, %v1650
  %v2240 = vmul.f32 %v224, %v1655
  %v2241 = vmul.f32 %v225, %v1660
  %v2242 = vmul.f32 %v226, %v1665
  %v2243 = vmul.f32 %v227, %v1670
  %v2244 = vmul.f32 %v228, %v1675
  %v2245 = vmul.f32 %v229, %v1680
  %v2246 = vmul.f32 %v230, %v1685
  %v2247 = vmul.f32 %v231, %v1690
  %v2248 = vmul.f32 %v232, %v1695
  %v2249 = vmul.f32 %v233, %v1700
  %v2250 = vmul.f32 %v234, %v1705
  %v2251 = vmul.f32 %v235, %v1710
  %v2252 = vmul.f32 %v236, %v1715
  %v2253 = vmul.f32 %v237, %v1720
  %v2254 = vmul.f32 %v238, %v1725
  %v2255 = vmul.f32 %v239, %v1730
  %v2256 = vmul.f32 %v240, %v1735
  %v2257 = vmul.f32 %v241, %v1740
  %v2258 = vmul.f32 %v242, %v1745
  %v2259 = vmul.f32 %v243, %v1750
  %v2260 = vmul.f32 %v244, %v1755
  %v2261 = vmul.f32 %v245, %v1760
  %v2262 = vmul.f32 %v246, %v1765
  %v2263 = vmul.f32 %v247, %v1770
  %v2264 = vmul.f32 %v248, %v1775
  %v2265 = vmul.f32 %v249, %v1780
  %v2266 = vmul.f32 %v250, %v1785
  %v2267 = vmul.f32 %v251, %v1790
  %v2268 = vmul.f32 %v252, %v1795
  %v2269 = vmul.f32 %v253, %v1800
  %v2270 = vmul.f32 %v254, %v1805
  %v2271 = vmul.f32 %v255, %v1810
  %v2272 = vmul.f32 %v256, %v1815
  %v2273 = vmul.f32 %v257, %v1820
  %v2274 = vmul.f32 %v258, %v1825
  %v2275 = vmul.f32 %v259, %v1830
  %v2276 = vmul.f32 %v260, %v1835
  %v2277 = vmul.f32 %v261, %v1840
  %v2278 = vmul.f32 %v262, %v1845
  %v2279 = vmul.f32 %v263, %v1850
  %v2280 = vmul.f32 %v264, %v1855
  %v2281 = vmul.f32 %v265, %v1860
  %v2282 = vmul.f32 %v266, %v1865
  %v2283 = vmul.f32 %v267, %v1870
  %v2284 = vmul.f32 %v268, %v1875
  %v2285 = vmul.f32 %v269, %v1880
  %v2286 = vmul.f32 %v270, %v1885
  %v2287 = vmul.f32 %v271, %v1890
  %v2288 = vmul.f32 %v272, %v1895
  %v2289 = vmul.f32 %v273, %v1900
  %v2290 = vmul.f32 %v274, %v1905
  %v2291 = vmul.f32 %v275, %v1910
  %v2292 = vmul.f32 %v276, %v1915
  %v2293 = vmul.f32 %v277, %v1920
  %v2294 = vmul.f32 %v278, %v1925
  %v2295 = vmul.f32 %v279, %v1930
  %v2296 = vmul.f32 %v280, %v1935
  %v2297 = vmul.f32 %v281, %v1940
  %v2298 = vmul.f32 %v282, %v1945
  %v2299 = vmul.f32 %v283, %v1950
  %v2300 = vmul.f32 %v284, %v1955
  %v2301 = vmul.f32 %v285, %v1960
  %v2302 = vmul.f32 %v286, %v1965
  %v2303 = vmul.f32 %v287, %v1970
  %v2304 = vmul.f32 %v288, %v1975
  %v2305 = vmul.f32 %v289, %v1980
  %v2306 = vmul.f32 %v290, %v1985
  %v2307 = vmul.f32 %v291, %v1990
  %v2308 = vmul.f32 %v292, %v1995
  %v2309 = vmul.f32 %v293, %v2000
  %v2310 = vmul.f32 %v294, %v2005
  %v2311 = vmul.f32 %v295, %v2010
  %v2312 = vmul.f32 %v296, %v2015
  %v2313 = vmul.f32 %v297, %v2020
  %v2314 = vmul.f32 %v298, %v2025
  %vm2315 = vcmask 400384
  %2316 = vst.msk [vmem:[%s2] sm:$0xff] %vm2315, %v2027
  %2317 = vst.msk [vmem:[%s2 + $0x8] sm:$0xff] %vm2315, %v2028
  %2318 = vst.msk [vmem:[%s2 + $0x10] sm:$0xff] %vm2315, %v2029
  %2319 = vst.msk [vmem:[%s2 + $0x18] sm:$0xff] %vm2315, %v2030
  %2320 = vst.msk [vmem:[%s2 + $0x20] sm:$0xff] %vm2315, %v2031
  %2321 = vst.msk [vmem:[%s2 + $0x28] sm:$0xff] %vm2315, %v2032
  %2322 = vst.msk [vmem:[%s2 + $0x30] sm:$0xff] %vm2315, %v2033
  %2323 = vst.msk [vmem:[%s2 + $0x38] sm:$0xff] %vm2315, %v2034
  %2324 = vst.msk [vmem:[%s2 + $0x40] sm:$0xff] %vm2315, %v2035
  %2325 = vst.msk [vmem:[%s2 + $0x48] sm:$0xff] %vm2315, %v2036
  %2326 = vst.msk [vmem:[%s2 + $0x50] sm:$0xff] %vm2315, %v2037
  %2327 = vst.msk [vmem:[%s2 + $0x58] sm:$0xff] %vm2315, %v2038
  %2328 = vst.msk [vmem:[%s2 + $0x60] sm:$0xff] %vm2315, %v2039
  %2329 = vst.msk [vmem:[%s2 + $0x68] sm:$0xff] %vm2315, %v2040
  %2330 = vst.msk [vmem:[%s2 + $0x70] sm:$0xff] %vm2315, %v2041
  %2331 = vst.msk [vmem:[%s2 + $0x78] sm:$0xff] %vm2315, %v2042
  %2332 = vst.msk [vmem:[%s2 + $0x80] sm:$0xff] %vm2315, %v2043
  %2333 = vst.msk [vmem:[%s2 + $0x88] sm:$0xff] %vm2315, %v2044
  %2334 = vst.msk [vmem:[%s2 + $0x90] sm:$0xff] %vm2315, %v2045
  %2335 = vst.msk [vmem:[%s2 + $0x98] sm:$0xff] %vm2315, %v2046
  %2336 = vst.msk [vmem:[%s2 + $0xa0] sm:$0xff] %vm2315, %v2047
  %2337 = vst.msk [vmem:[%s2 + $0xa8] sm:$0xff] %vm2315, %v2048
  %2338 = vst.msk [vmem:[%s2 + $0xb0] sm:$0xff] %vm2315, %v2049
  %2339 = vst.msk [vmem:[%s2 + $0xb8] sm:$0xff] %vm2315, %v2050
  %2340 = vst.msk [vmem:[%s2 + $0xc0] sm:$0xff] %vm2315, %v2051
  %2341 = vst.msk [vmem:[%s2 + $0xc8] sm:$0xff] %vm2315, %v2052
  %2342 = vst.msk [vmem:[%s2 + $0xd0] sm:$0xff] %vm2315, %v2053
  %2343 = vst.msk [vmem:[%s2 + $0xd8] sm:$0xff] %vm2315, %v2054
  %2344 = vst.msk [vmem:[%s2 + $0xe0] sm:$0xff] %vm2315, %v2055
  %2345 = vst.msk [vmem:[%s2 + $0xe8] sm:$0xff] %vm2315, %v2056
  %2346 = vst.msk [vmem:[%s2 + $0xf0] sm:$0xff] %vm2315, %v2057
  %2347 = vst.msk [vmem:[%s2 + $0xf8] sm:$0xff] %vm2315, %v2058
  %2348 = vst.msk [vmem:[%s2 + $0x100] sm:$0xff] %vm2315, %v2059
  %2349 = vst.msk [vmem:[%s2 + $0x108] sm:$0xff] %vm2315, %v2060
  %2350 = vst.msk [vmem:[%s2 + $0x110] sm:$0xff] %vm2315, %v2061
  %2351 = vst.msk [vmem:[%s2 + $0x118] sm:$0xff] %vm2315, %v2062
  %2352 = vst.msk [vmem:[%s2 + $0x120] sm:$0xff] %vm2315, %v2063
  %2353 = vst.msk [vmem:[%s2 + $0x128] sm:$0xff] %vm2315, %v2064
  %2354 = vst.msk [vmem:[%s2 + $0x130] sm:$0xff] %vm2315, %v2065
  %2355 = vst.msk [vmem:[%s2 + $0x138] sm:$0xff] %vm2315, %v2066
  %2356 = vst.msk [vmem:[%s2 + $0x140] sm:$0xff] %vm2315, %v2067
  %2357 = vst.msk [vmem:[%s2 + $0x148] sm:$0xff] %vm2315, %v2068
  %2358 = vst.msk [vmem:[%s2 + $0x150] sm:$0xff] %vm2315, %v2069
  %2359 = vst.msk [vmem:[%s2 + $0x158] sm:$0xff] %vm2315, %v2070
  %2360 = vst.msk [vmem:[%s2 + $0x160] sm:$0xff] %vm2315, %v2071
  %2361 = vst.msk [vmem:[%s2 + $0x168] sm:$0xff] %vm2315, %v2072
  %2362 = vst.msk [vmem:[%s2 + $0x170] sm:$0xff] %vm2315, %v2073
  %2363 = vst.msk [vmem:[%s2 + $0x178] sm:$0xff] %vm2315, %v2074
  %2364 = vst.msk [vmem:[%s2 + $0x180] sm:$0xff] %vm2315, %v2075
  %2365 = vst.msk [vmem:[%s2 + $0x188] sm:$0xff] %vm2315, %v2076
  %2366 = vst.msk [vmem:[%s2 + $0x190] sm:$0xff] %vm2315, %v2077
  %2367 = vst.msk [vmem:[%s2 + $0x198] sm:$0xff] %vm2315, %v2078
  %2368 = vst.msk [vmem:[%s2 + $0x1a0] sm:$0xff] %vm2315, %v2079
  %2369 = vst.msk [vmem:[%s2 + $0x1a8] sm:$0xff] %vm2315, %v2080
  %2370 = vst.msk [vmem:[%s2 + $0x1b0] sm:$0xff] %vm2315, %v2081
  %2371 = vst.msk [vmem:[%s2 + $0x1b8] sm:$0xff] %vm2315, %v2082
  %2372 = vst.msk [vmem:[%s2 + $0x1c0] sm:$0xff] %vm2315, %v2083
  %2373 = vst.msk [vmem:[%s2 + $0x1c8] sm:$0xff] %vm2315, %v2084
  %2374 = vst.msk [vmem:[%s2 + $0x1d0] sm:$0xff] %vm2315, %v2085
  %2375 = vst.msk [vmem:[%s2 + $0x1d8] sm:$0xff] %vm2315, %v2086
  %2376 = vst.msk [vmem:[%s2 + $0x1e0] sm:$0xff] %vm2315, %v2087
  %2377 = vst.msk [vmem:[%s2 + $0x1e8] sm:$0xff] %vm2315, %v2088
  %2378 = vst.msk [vmem:[%s2 + $0x1f0] sm:$0xff] %vm2315, %v2089
  %2379 = vst.msk [vmem:[%s2 + $0x1f8] sm:$0xff] %vm2315, %v2090
  %2380 = vst.msk [vmem:[%s2 + $0x200] sm:$0xff] %vm2315, %v2091
  %2381 = vst.msk [vmem:[%s2 + $0x208] sm:$0xff] %vm2315, %v2092
  %2382 = vst.msk [vmem:[%s2 + $0x210] sm:$0xff] %vm2315, %v2093
  %2383 = vst.msk [vmem:[%s2 + $0x218] sm:$0xff] %vm2315, %v2094
  %2384 = vst.msk [vmem:[%s2 + $0x220] sm:$0xff] %vm2315, %v2095
  %2385 = vst.msk [vmem:[%s2 + $0x228] sm:$0xff] %vm2315, %v2096
  %2386 = vst.msk [vmem:[%s2 + $0x230] sm:$0xff] %vm2315, %v2097
  %2387 = vst.msk [vmem:[%s2 + $0x238] sm:$0xff] %vm2315, %v2098
  %2388 = vst.msk [vmem:[%s2 + $0x240] sm:$0xff] %vm2315, %v2099
  %2389 = vst.msk [vmem:[%s2 + $0x248] sm:$0xff] %vm2315, %v2100
  %2390 = vst.msk [vmem:[%s2 + $0x250] sm:$0xff] %vm2315, %v2101
  %2391 = vst.msk [vmem:[%s2 + $0x258] sm:$0xff] %vm2315, %v2102
  %2392 = vst.msk [vmem:[%s2 + $0x260] sm:$0xff] %vm2315, %v2103
  %2393 = vst.msk [vmem:[%s2 + $0x268] sm:$0xff] %vm2315, %v2104
  %2394 = vst.msk [vmem:[%s2 + $0x270] sm:$0xff] %vm2315, %v2105
  %2395 = vst.msk [vmem:[%s2 + $0x278] sm:$0xff] %vm2315, %v2106
  %2396 = vst.msk [vmem:[%s2 + $0x280] sm:$0xff] %vm2315, %v2107
  %2397 = vst.msk [vmem:[%s2 + $0x288] sm:$0xff] %vm2315, %v2108
  %2398 = vst.msk [vmem:[%s2 + $0x290] sm:$0xff] %vm2315, %v2109
  %2399 = vst.msk [vmem:[%s2 + $0x298] sm:$0xff] %vm2315, %v2110
  %2400 = vst.msk [vmem:[%s2 + $0x2a0] sm:$0xff] %vm2315, %v2111
  %2401 = vst.msk [vmem:[%s2 + $0x2a8] sm:$0xff] %vm2315, %v2112
  %2402 = vst.msk [vmem:[%s2 + $0x2b0] sm:$0xff] %vm2315, %v2113
  %2403 = vst.msk [vmem:[%s2 + $0x2b8] sm:$0xff] %vm2315, %v2114
  %2404 = vst.msk [vmem:[%s2 + $0x2c0] sm:$0xff] %vm2315, %v2115
  %2405 = vst.msk [vmem:[%s2 + $0x2c8] sm:$0xff] %vm2315, %v2116
  %2406 = vst.msk [vmem:[%s2 + $0x2d0] sm:$0xff] %vm2315, %v2117
  %2407 = vst.msk [vmem:[%s2 + $0x2d8] sm:$0xff] %vm2315, %v2118
  %2408 = vst.msk [vmem:[%s2 + $0x2e0] sm:$0xff] %vm2315, %v2119
  %2409 = vst.msk [vmem:[%s2 + $0x2e8] sm:$0xff] %vm2315, %v2120
  %2410 = vst.msk [vmem:[%s2 + $0x2f0] sm:$0xff] %vm2315, %v2121
  %2411 = vst.msk [vmem:[%s2 + $0x2f8] sm:$0xff] %vm2315, %v2122
  %2412 = vst.msk [vmem:[%s2 + $0x300] sm:$0xff] %vm2315, %v2123
  %2413 = vst.msk [vmem:[%s2 + $0x308] sm:$0xff] %vm2315, %v2124
  %2414 = vst.msk [vmem:[%s2 + $0x310] sm:$0xff] %vm2315, %v2125
  %2415 = vst.msk [vmem:[%s2 + $0x318] sm:$0xff] %vm2315, %v2126
  %2416 = vst.msk [vmem:[%s2 + $0x320] sm:$0xff] %vm2315, %v2127
  %2417 = vst.msk [vmem:[%s2 + $0x328] sm:$0xff] %vm2315, %v2128
  %2418 = vst.msk [vmem:[%s2 + $0x330] sm:$0xff] %vm2315, %v2129
  %2419 = vst.msk [vmem:[%s2 + $0x338] sm:$0xff] %vm2315, %v2130
  %2420 = vst.msk [vmem:[%s2 + $0x340] sm:$0xff] %vm2315, %v2131
  %2421 = vst.msk [vmem:[%s2 + $0x348] sm:$0xff] %vm2315, %v2132
  %2422 = vst.msk [vmem:[%s2 + $0x350] sm:$0xff] %vm2315, %v2133
  %2423 = vst.msk [vmem:[%s2 + $0x358] sm:$0xff] %vm2315, %v2134
  %2424 = vst.msk [vmem:[%s2 + $0x360] sm:$0xff] %vm2315, %v2135
  %2425 = vst.msk [vmem:[%s2 + $0x368] sm:$0xff] %vm2315, %v2136
  %2426 = vst.msk [vmem:[%s2 + $0x370] sm:$0xff] %vm2315, %v2137
  %2427 = vst.msk [vmem:[%s2 + $0x378] sm:$0xff] %vm2315, %v2138
  %2428 = vst.msk [vmem:[%s2 + $0x380] sm:$0xff] %vm2315, %v2139
  %2429 = vst.msk [vmem:[%s2 + $0x388] sm:$0xff] %vm2315, %v2140
  %2430 = vst.msk [vmem:[%s2 + $0x390] sm:$0xff] %vm2315, %v2141
  %2431 = vst.msk [vmem:[%s2 + $0x398] sm:$0xff] %vm2315, %v2142
  %2432 = vst.msk [vmem:[%s2 + $0x3a0] sm:$0xff] %vm2315, %v2143
  %2433 = vst.msk [vmem:[%s2 + $0x3a8] sm:$0xff] %vm2315, %v2144
  %2434 = vst.msk [vmem:[%s2 + $0x3b0] sm:$0xff] %vm2315, %v2145
  %2435 = vst.msk [vmem:[%s2 + $0x3b8] sm:$0xff] %vm2315, %v2146
  %2436 = vst.msk [vmem:[%s2 + $0x3c0] sm:$0xff] %vm2315, %v2147
  %2437 = vst.msk [vmem:[%s2 + $0x3c8] sm:$0xff] %vm2315, %v2148
  %2438 = vst.msk [vmem:[%s2 + $0x3d0] sm:$0xff] %vm2315, %v2149
  %2439 = vst.msk [vmem:[%s2 + $0x3d8] sm:$0xff] %vm2315, %v2150
  %2440 = vst.msk [vmem:[%s2 + $0x3e0] sm:$0xff] %vm2315, %v2151
  %2441 = vst.msk [vmem:[%s2 + $0x3e8] sm:$0xff] %vm2315, %v2152
  %2442 = vst.msk [vmem:[%s2 + $0x3f0] sm:$0xff] %vm2315, %v2153
  %2443 = vst.msk [vmem:[%s2 + $0x3f8] sm:$0xff] %vm2315, %v2154
  %2444 = vst.msk [vmem:[%s2 + $0x400] sm:$0xff] %vm2315, %v2155
  %2445 = vst.msk [vmem:[%s2 + $0x408] sm:$0xff] %vm2315, %v2156
  %2446 = vst.msk [vmem:[%s2 + $0x410] sm:$0xff] %vm2315, %v2157
  %2447 = vst.msk [vmem:[%s2 + $0x418] sm:$0xff] %vm2315, %v2158
  %2448 = vst.msk [vmem:[%s2 + $0x420] sm:$0xff] %vm2315, %v2159
  %2449 = vst.msk [vmem:[%s2 + $0x428] sm:$0xff] %vm2315, %v2160
  %2450 = vst.msk [vmem:[%s2 + $0x430] sm:$0xff] %vm2315, %v2161
  %2451 = vst.msk [vmem:[%s2 + $0x438] sm:$0xff] %vm2315, %v2162
  %2452 = vst.msk [vmem:[%s2 + $0x440] sm:$0xff] %vm2315, %v2163
  %2453 = vst.msk [vmem:[%s2 + $0x448] sm:$0xff] %vm2315, %v2164
  %2454 = vst.msk [vmem:[%s2 + $0x450] sm:$0xff] %vm2315, %v2165
  %2455 = vst.msk [vmem:[%s2 + $0x458] sm:$0xff] %vm2315, %v2166
  %2456 = vst.msk [vmem:[%s2 + $0x460] sm:$0xff] %vm2315, %v2167
  %2457 = vst.msk [vmem:[%s2 + $0x468] sm:$0xff] %vm2315, %v2168
  %2458 = vst.msk [vmem:[%s2 + $0x470] sm:$0xff] %vm2315, %v2169
  %2459 = vst.msk [vmem:[%s2 + $0x478] sm:$0xff] %vm2315, %v2170
  %2460 = vst.msk [vmem:[%s2 + $0x480] sm:$0xff] %vm2315, %v2171
  %2461 = vst.msk [vmem:[%s2 + $0x488] sm:$0xff] %vm2315, %v2172
  %2462 = vst.msk [vmem:[%s2 + $0x490] sm:$0xff] %vm2315, %v2173
  %2463 = vst.msk [vmem:[%s2 + $0x498] sm:$0xff] %vm2315, %v2174
  %2464 = vst.msk [vmem:[%s2 + $0x4a0] sm:$0xff] %vm2315, %v2175
  %2465 = vst.msk [vmem:[%s2 + $0x4a8] sm:$0xff] %vm2315, %v2176
  %2466 = vst.msk [vmem:[%s2 + $0x4b0] sm:$0xff] %vm2315, %v2177
  %2467 = vst.msk [vmem:[%s2 + $0x4b8] sm:$0xff] %vm2315, %v2178
  %2468 = vst.msk [vmem:[%s2 + $0x4c0] sm:$0xff] %vm2315, %v2179
  %2469 = vst.msk [vmem:[%s2 + $0x4c8] sm:$0xff] %vm2315, %v2180
  %2470 = vst.msk [vmem:[%s2 + $0x4d0] sm:$0xff] %vm2315, %v2181
  %2471 = vst.msk [vmem:[%s2 + $0x4d8] sm:$0xff] %vm2315, %v2182
  %2472 = vst.msk [vmem:[%s2 + $0x4e0] sm:$0xff] %vm2315, %v2183
  %2473 = vst.msk [vmem:[%s2 + $0x4e8] sm:$0xff] %vm2315, %v2184
  %2474 = vst.msk [vmem:[%s2 + $0x4f0] sm:$0xff] %vm2315, %v2185
  %2475 = vst.msk [vmem:[%s2 + $0x4f8] sm:$0xff] %vm2315, %v2186
  %2476 = vst.msk [vmem:[%s2 + $0x500] sm:$0xff] %vm2315, %v2187
  %2477 = vst.msk [vmem:[%s2 + $0x508] sm:$0xff] %vm2315, %v2188
  %2478 = vst.msk [vmem:[%s2 + $0x510] sm:$0xff] %vm2315, %v2189
  %2479 = vst.msk [vmem:[%s2 + $0x518] sm:$0xff] %vm2315, %v2190
  %2480 = vst.msk [vmem:[%s2 + $0x520] sm:$0xff] %vm2315, %v2191
  %2481 = vst.msk [vmem:[%s2 + $0x528] sm:$0xff] %vm2315, %v2192
  %2482 = vst.msk [vmem:[%s2 + $0x530] sm:$0xff] %vm2315, %v2193
  %2483 = vst.msk [vmem:[%s2 + $0x538] sm:$0xff] %vm2315, %v2194
  %2484 = vst.msk [vmem:[%s2 + $0x540] sm:$0xff] %vm2315, %v2195
  %2485 = vst.msk [vmem:[%s2 + $0x548] sm:$0xff] %vm2315, %v2196
  %2486 = vst.msk [vmem:[%s2 + $0x550] sm:$0xff] %vm2315, %v2197
  %2487 = vst.msk [vmem:[%s2 + $0x558] sm:$0xff] %vm2315, %v2198
  %2488 = vst.msk [vmem:[%s2 + $0x560] sm:$0xff] %vm2315, %v2199
  %2489 = vst.msk [vmem:[%s2 + $0x568] sm:$0xff] %vm2315, %v2200
  %2490 = vst.msk [vmem:[%s2 + $0x570] sm:$0xff] %vm2315, %v2201
  %2491 = vst.msk [vmem:[%s2 + $0x578] sm:$0xff] %vm2315, %v2202
  %2492 = vst.msk [vmem:[%s2 + $0x580] sm:$0xff] %vm2315, %v2203
  %2493 = vst.msk [vmem:[%s2 + $0x588] sm:$0xff] %vm2315, %v2204
  %2494 = vst.msk [vmem:[%s2 + $0x590] sm:$0xff] %vm2315, %v2205
  %2495 = vst.msk [vmem:[%s2 + $0x598] sm:$0xff] %vm2315, %v2206
  %2496 = vst.msk [vmem:[%s2 + $0x5a0] sm:$0xff] %vm2315, %v2207
  %2497 = vst.msk [vmem:[%s2 + $0x5a8] sm:$0xff] %vm2315, %v2208
  %2498 = vst.msk [vmem:[%s2 + $0x5b0] sm:$0xff] %vm2315, %v2209
  %2499 = vst.msk [vmem:[%s2 + $0x5b8] sm:$0xff] %vm2315, %v2210
  %2500 = vst.msk [vmem:[%s2 + $0x5c0] sm:$0xff] %vm2315, %v2211
  %2501 = vst.msk [vmem:[%s2 + $0x5c8] sm:$0xff] %vm2315, %v2212
  %2502 = vst.msk [vmem:[%s2 + $0x5d0] sm:$0xff] %vm2315, %v2213
  %2503 = vst.msk [vmem:[%s2 + $0x5d8] sm:$0xff] %vm2315, %v2214
  %2504 = vst.msk [vmem:[%s2 + $0x5e0] sm:$0xff] %vm2315, %v2215
  %2505 = vst.msk [vmem:[%s2 + $0x5e8] sm:$0xff] %vm2315, %v2216
  %2506 = vst.msk [vmem:[%s2 + $0x5f0] sm:$0xff] %vm2315, %v2217
  %2507 = vst.msk [vmem:[%s2 + $0x5f8] sm:$0xff] %vm2315, %v2218
  %2508 = vst.msk [vmem:[%s2 + $0x600] sm:$0xff] %vm2315, %v2219
  %2509 = vst.msk [vmem:[%s2 + $0x608] sm:$0xff] %vm2315, %v2220
  %2510 = vst.msk [vmem:[%s2 + $0x610] sm:$0xff] %vm2315, %v2221
  %2511 = vst.msk [vmem:[%s2 + $0x618] sm:$0xff] %vm2315, %v2222
  %2512 = vst.msk [vmem:[%s2 + $0x620] sm:$0xff] %vm2315, %v2223
  %2513 = vst.msk [vmem:[%s2 + $0x628] sm:$0xff] %vm2315, %v2224
  %2514 = vst.msk [vmem:[%s2 + $0x630] sm:$0xff] %vm2315, %v2225
  %2515 = vst.msk [vmem:[%s2 + $0x638] sm:$0xff] %vm2315, %v2226
  %2516 = vst.msk [vmem:[%s2 + $0x640] sm:$0xff] %vm2315, %v2227
  %2517 = vst.msk [vmem:[%s2 + $0x648] sm:$0xff] %vm2315, %v2228
  %2518 = vst.msk [vmem:[%s2 + $0x650] sm:$0xff] %vm2315, %v2229
  %2519 = vst.msk [vmem:[%s2 + $0x658] sm:$0xff] %vm2315, %v2230
  %2520 = vst.msk [vmem:[%s2 + $0x660] sm:$0xff] %vm2315, %v2231
  %2521 = vst.msk [vmem:[%s2 + $0x668] sm:$0xff] %vm2315, %v2232
  %2522 = vst.msk [vmem:[%s2 + $0x670] sm:$0xff] %vm2315, %v2233
  %2523 = vst.msk [vmem:[%s2 + $0x678] sm:$0xff] %vm2315, %v2234
  %2524 = vst.msk [vmem:[%s2 + $0x680] sm:$0xff] %vm2315, %v2235
  %2525 = vst.msk [vmem:[%s2 + $0x688] sm:$0xff] %vm2315, %v2236
  %2526 = vst.msk [vmem:[%s2 + $0x690] sm:$0xff] %vm2315, %v2237
  %2527 = vst.msk [vmem:[%s2 + $0x698] sm:$0xff] %vm2315, %v2238
  %2528 = vst.msk [vmem:[%s2 + $0x6a0] sm:$0xff] %vm2315, %v2239
  %2529 = vst.msk [vmem:[%s2 + $0x6a8] sm:$0xff] %vm2315, %v2240
  %2530 = vst.msk [vmem:[%s2 + $0x6b0] sm:$0xff] %vm2315, %v2241
  %2531 = vst.msk [vmem:[%s2 + $0x6b8] sm:$0xff] %vm2315, %v2242
  %2532 = vst.msk [vmem:[%s2 + $0x6c0] sm:$0xff] %vm2315, %v2243
  %2533 = vst.msk [vmem:[%s2 + $0x6c8] sm:$0xff] %vm2315, %v2244
  %2534 = vst.msk [vmem:[%s2 + $0x6d0] sm:$0xff] %vm2315, %v2245
  %2535 = vst.msk [vmem:[%s2 + $0x6d8] sm:$0xff] %vm2315, %v2246
  %2536 = vst.msk [vmem:[%s2 + $0x6e0] sm:$0xff] %vm2315, %v2247
  %2537 = vst.msk [vmem:[%s2 + $0x6e8] sm:$0xff] %vm2315, %v2248
  %2538 = vst.msk [vmem:[%s2 + $0x6f0] sm:$0xff] %vm2315, %v2249
  %2539 = vst.msk [vmem:[%s2 + $0x6f8] sm:$0xff] %vm2315, %v2250
  %2540 = vst.msk [vmem:[%s2 + $0x700] sm:$0xff] %vm2315, %v2251
  %2541 = vst.msk [vmem:[%s2 + $0x708] sm:$0xff] %vm2315, %v2252
  %2542 = vst.msk [vmem:[%s2 + $0x710] sm:$0xff] %vm2315, %v2253
  %2543 = vst.msk [vmem:[%s2 + $0x718] sm:$0xff] %vm2315, %v2254
  %2544 = vst.msk [vmem:[%s2 + $0x720] sm:$0xff] %vm2315, %v2255
  %2545 = vst.msk [vmem:[%s2 + $0x728] sm:$0xff] %vm2315, %v2256
  %2546 = vst.msk [vmem:[%s2 + $0x730] sm:$0xff] %vm2315, %v2257
  %2547 = vst.msk [vmem:[%s2 + $0x738] sm:$0xff] %vm2315, %v2258
  %2548 = vst.msk [vmem:[%s2 + $0x740] sm:$0xff] %vm2315, %v2259
  %2549 = vst.msk [vmem:[%s2 + $0x748] sm:$0xff] %vm2315, %v2260
  %2550 = vst.msk [vmem:[%s2 + $0x750] sm:$0xff] %vm2315, %v2261
  %2551 = vst.msk [vmem:[%s2 + $0x758] sm:$0xff] %vm2315, %v2262
  %2552 = vst.msk [vmem:[%s2 + $0x760] sm:$0xff] %vm2315, %v2263
  %2553 = vst.msk [vmem:[%s2 + $0x768] sm:$0xff] %vm2315, %v2264
  %2554 = vst.msk [vmem:[%s2 + $0x770] sm:$0xff] %vm2315, %v2265
  %2555 = vst.msk [vmem:[%s2 + $0x778] sm:$0xff] %vm2315, %v2266
  %2556 = vst.msk [vmem:[%s2 + $0x780] sm:$0xff] %vm2315, %v2267
  %2557 = vst.msk [vmem:[%s2 + $0x788] sm:$0xff] %vm2315, %v2268
  %2558 = vst.msk [vmem:[%s2 + $0x790] sm:$0xff] %vm2315, %v2269
  %2559 = vst.msk [vmem:[%s2 + $0x798] sm:$0xff] %vm2315, %v2270
  %2560 = vst.msk [vmem:[%s2 + $0x7a0] sm:$0xff] %vm2315, %v2271
  %2561 = vst.msk [vmem:[%s2 + $0x7a8] sm:$0xff] %vm2315, %v2272
  %2562 = vst.msk [vmem:[%s2 + $0x7b0] sm:$0xff] %vm2315, %v2273
  %2563 = vst.msk [vmem:[%s2 + $0x7b8] sm:$0xff] %vm2315, %v2274
  %2564 = vst.msk [vmem:[%s2 + $0x7c0] sm:$0xff] %vm2315, %v2275
  %2565 = vst.msk [vmem:[%s2 + $0x7c8] sm:$0xff] %vm2315, %v2276
  %2566 = vst.msk [vmem:[%s2 + $0x7d0] sm:$0xff] %vm2315, %v2277
  %2567 = vst.msk [vmem:[%s2 + $0x7d8] sm:$0xff] %vm2315, %v2278
  %2568 = vst.msk [vmem:[%s2 + $0x7e0] sm:$0xff] %vm2315, %v2279
  %2569 = vst.msk [vmem:[%s2 + $0x7e8] sm:$0xff] %vm2315, %v2280
  %2570 = vst.msk [vmem:[%s2 + $0x7f0] sm:$0xff] %vm2315, %v2281
  %2571 = vst.msk [vmem:[%s2 + $0x7f8] sm:$0xff] %vm2315, %v2282
  %2572 = vst.msk [vmem:[%s2 + $0x800] sm:$0xff] %vm2315, %v2283
  %2573 = vst.msk [vmem:[%s2 + $0x808] sm:$0xff] %vm2315, %v2284
  %2574 = vst.msk [vmem:[%s2 + $0x810] sm:$0xff] %vm2315, %v2285
  %2575 = vst.msk [vmem:[%s2 + $0x818] sm:$0xff] %vm2315, %v2286
  %2576 = vst.msk [vmem:[%s2 + $0x820] sm:$0xff] %vm2315, %v2287
  %2577 = vst.msk [vmem:[%s2 + $0x828] sm:$0xff] %vm2315, %v2288
  %2578 = vst.msk [vmem:[%s2 + $0x830] sm:$0xff] %vm2315, %v2289
  %2579 = vst.msk [vmem:[%s2 + $0x838] sm:$0xff] %vm2315, %v2290
  %2580 = vst.msk [vmem:[%s2 + $0x840] sm:$0xff] %vm2315, %v2291
  %2581 = vst.msk [vmem:[%s2 + $0x848] sm:$0xff] %vm2315, %v2292
  %2582 = vst.msk [vmem:[%s2 + $0x850] sm:$0xff] %vm2315, %v2293
  %2583 = vst.msk [vmem:[%s2 + $0x858] sm:$0xff] %vm2315, %v2294
  %2584 = vst.msk [vmem:[%s2 + $0x860] sm:$0xff] %vm2315, %v2295
  %2585 = vst.msk [vmem:[%s2 + $0x868] sm:$0xff] %vm2315, %v2296
  %2586 = vst.msk [vmem:[%s2 + $0x870] sm:$0xff] %vm2315, %v2297
  %2587 = vst.msk [vmem:[%s2 + $0x878] sm:$0xff] %vm2315, %v2298
  %2588 = vst.msk [vmem:[%s2 + $0x880] sm:$0xff] %vm2315, %v2299
  %2589 = vst.msk [vmem:[%s2 + $0x888] sm:$0xff] %vm2315, %v2300
  %2590 = vst.msk [vmem:[%s2 + $0x890] sm:$0xff] %vm2315, %v2301
  %2591 = vst.msk [vmem:[%s2 + $0x898] sm:$0xff] %vm2315, %v2302
  %2592 = vst.msk [vmem:[%s2 + $0x8a0] sm:$0xff] %vm2315, %v2303
  %2593 = vst.msk [vmem:[%s2 + $0x8a8] sm:$0xff] %vm2315, %v2304
  %2594 = vst.msk [vmem:[%s2 + $0x8b0] sm:$0xff] %vm2315, %v2305
  %2595 = vst.msk [vmem:[%s2 + $0x8b8] sm:$0xff] %vm2315, %v2306
  %2596 = vst.msk [vmem:[%s2 + $0x8c0] sm:$0xff] %vm2315, %v2307
  %2597 = vst.msk [vmem:[%s2 + $0x8c8] sm:$0xff] %vm2315, %v2308
  %2598 = vst.msk [vmem:[%s2 + $0x8d0] sm:$0xff] %vm2315, %v2309
  %2599 = vst.msk [vmem:[%s2 + $0x8d8] sm:$0xff] %vm2315, %v2310
  %2600 = vst.msk [vmem:[%s2 + $0x8e0] sm:$0xff] %vm2315, %v2311
  %2601 = vst.msk [vmem:[%s2 + $0x8e8] sm:$0xff] %vm2315, %v2312
  %2602 = vst.msk [vmem:[%s2 + $0x8f0] sm:$0xff] %vm2315, %v2313
  %2603 = vst.msk [vmem:[%s2 + $0x8f8] sm:$0xff] %vm2315, %v2314
  // Predicated region
  $region10: #{tpu_custom_call.1} parent=0 // pred_check
    _
  $region11: #{tpu_custom_call.1} parent=0 // pred_check_branch
    %2605 = sbr.rel (0) target = $region13
  $region12: #{tpu_custom_call.1} parent=0 // pred_region
    _
  $region13: #{tpu_custom_call.1} parent=0 // pred_fallthru
    _
  // Predicated region
  $region14: #{tpu_custom_call.1} parent=0 // pred_check
    _
  $region15: #{tpu_custom_call.1} parent=0 // pred_check_branch
    %2607 = sbr.rel (0) target = $region17
  $region16: #{tpu_custom_call.1} parent=0 // pred_region
    _
  $region17: #{tpu_custom_call.1} parent=0 // pred_fallthru
    _

</llo_original>
